<compile_context>
chip_gen: v7x
topology: tpu7x:2x2x1
jax: 0.10.0
libtpu: 0.0.40
codegen_flags: <defaults>
</compile_context>

<pallas_src>
import functools

import numpy as np
import jax
import jax.numpy as jnp
from jax import lax
from jax.experimental import pallas as pl
from jax.experimental.pallas import tpu as pltpu


def _round_up(x, m):
    return (x + m - 1) // m * m


def _smooth_l1(t, r):
    d = jnp.abs(t - r)
    return jnp.where(d <= 1.0 / 9.0, 0.5 * 9.0 * d * d, d - 0.5 / 9.0)


def _focal_loss_kernel(cls_ref, reg_ref, anc_ref, ann_ref, ann_t_ref, out_ref,
                       acc_cls_a, acc_cls_b, acc_reg, acc_pos, *, alpha, gamma):
    t = pl.program_id(2)
    n_t = pl.num_programs(2)

    # ---- init per-(image, half) accumulators at the first anchor tile ----
    @pl.when(t == 0)
    def _():
        acc_cls_a[...] = jnp.zeros_like(acc_cls_a)
        acc_cls_b[...] = jnp.zeros_like(acc_cls_b)
        acc_reg[...] = jnp.zeros_like(acc_reg)
        acc_pos[...] = jnp.zeros_like(acc_pos)

    TA, C = cls_ref.shape[1], cls_ref.shape[2]
    M = ann_ref.shape[1]

    x = jnp.clip(cls_ref[0], 1e-4, 1.0 - 1e-4)     # (TA, C)  natural layout
    regression = reg_ref[0]                         # (4, TA)  anchors on lanes
    anchor = anc_ref[0]                             # (4, TA)
    ann = ann_ref[0]                                # (M, 5)
    ann_t = ann_t_ref[0]                            # (5, M)

    ax0, ay0 = anchor[0:1, :], anchor[1:2, :]       # (1, TA)
    ax1, ay1 = anchor[2:3, :], anchor[3:4, :]
    bx0, by0 = ann[:, 0:1], ann[:, 1:2]             # (M, 1)
    bx1, by1 = ann[:, 2:3], ann[:, 3:4]
    blbl = ann[:, 4:5]

    valid = blbl != -1.0                            # (M, 1)

    # ---- IoU (M, TA): annotations on sublanes, anchors on lanes ----
    area_b = (bx1 - bx0) * (by1 - by0)              # (M, 1)
    area_a = (ax1 - ax0) * (ay1 - ay0)              # (1, TA)
    iw = jnp.maximum(jnp.minimum(ax1, bx1) - jnp.maximum(ax0, bx0), 0.0)
    ih = jnp.maximum(jnp.minimum(ay1, by1) - jnp.maximum(ay0, by0), 0.0)
    inter = iw * ih
    ua = jnp.maximum(area_a + area_b - inter, 1e-8)
    r = pl.reciprocal(ua, approx=True)              # EUP slot
    r = r * (2.0 - ua * r)                          # one Newton step -> ~f32 exact thresholds
    iou = jnp.where(valid, inter * r, -1.0)         # mask padded annotations

    # ---- max / first-argmax over annotations (like torch.max) ----
    iou_max = jnp.max(iou, axis=0, keepdims=True)                  # (1, TA)
    m_idx = lax.broadcasted_iota(jnp.int32, (M, TA), 0)
    arg_idx = jnp.min(jnp.where(iou == iou_max, m_idx, M), axis=0, keepdims=True)
    onehot = (m_idx == arg_idx).astype(jnp.float32)                # (M, TA)

    positive = iou_max >= 0.5                                      # (1, TA)
    pos_f = positive.astype(jnp.float32)
    # anchors that contribute to the classification sum (targets != -1)
    mask_f = jnp.logical_or(iou_max < 0.4, positive).astype(jnp.float32)

    # ---- classification loss, term A: every (anchor, class) pair as if target == 0 ----
    # loss0(x) = (1-alpha) * x^gamma * (-log(1-x)); the per-anchor mask weighting and the
    # reduction over anchors are fused into a single MXU matmul (1,TA) @ (TA,C) -> (1,C).
    if gamma == 2.0:                                # static: square instead of pow
        pow_x = x * x
    else:
        pow_x = jnp.power(x, gamma)
    loss0_mat = ((1.0 - alpha) * pow_x) * (-jnp.log(1.0 - x))      # (TA, C)
    acc_cls_a[...] += jnp.dot(mask_f, loss0_mat,
                              preferred_element_type=jnp.float32)  # (1, C)

    # ---- classification loss, term B: correct the assigned class of positive anchors ----
    # gathered[m, t] = x[t, label(m)] via one MXU matmul (contract over the class axis).
    lbl_oh = (lax.broadcasted_iota(jnp.int32, (M, C), 1)
              == blbl.astype(jnp.int32)).astype(jnp.float32)       # (M, C)
    gathered = lax.dot_general(lbl_oh, x, (((1,), (1,)), ((), ())),
                               preferred_element_type=jnp.float32)  # (M, TA)
    x_sel = jnp.sum(onehot * gathered, axis=0, keepdims=True)       # (1, TA)
    if gamma == 2.0:
        pow_sel1 = (1.0 - x_sel) * (1.0 - x_sel)
        pow_sel0 = x_sel * x_sel
    else:
        pow_sel1 = jnp.power(1.0 - x_sel, gamma)
        pow_sel0 = jnp.power(x_sel, gamma)
    l1 = (alpha * pow_sel1) * (-jnp.log(x_sel))          # target == 1 branch at assigned class
    l0 = ((1.0 - alpha) * pow_sel0) * (-jnp.log(1.0 - x_sel))
    acc_cls_b[...] += jnp.where(positive, l1 - l0, 0.0)  # select -> no Inf/NaN leakage
    acc_pos[...] += pos_f

    # ---- smooth-L1 regression loss on positive anchors (lane-dense rows) ----
    assigned = jnp.dot(ann_t, onehot, preferred_element_type=jnp.float32)   # (5, TA)
    asg_x0, asg_y0 = assigned[0:1, :], assigned[1:2, :]
    asg_x1, asg_y1 = assigned[2:3, :], assigned[3:4, :]

    aw = ax1 - ax0
    ah = ay1 - ay0
    acx = ax0 + 0.5 * aw
    acy = ay0 + 0.5 * ah
    gw_raw = asg_x1 - asg_x0
    gh_raw = asg_y1 - asg_y0
    gcx = asg_x0 + 0.5 * gw_raw
    gcy = asg_y0 + 0.5 * gh_raw
    gw = jnp.maximum(gw_raw, 1.0)
    gh = jnp.maximum(gh_raw, 1.0)

    inv_aw = 1.0 / aw
    inv_ah = 1.0 / ah
    tdx = (gcx - acx) * inv_aw * 10.0      # / 0.1
    tdy = (gcy - acy) * inv_ah * 10.0
    tdw = jnp.log(gw * inv_aw) * 5.0       # / 0.2
    tdh = jnp.log(gh * inv_ah) * 5.0

    rl = (_smooth_l1(tdx, regression[0:1, :]) + _smooth_l1(tdy, regression[1:2, :]) +
          _smooth_l1(tdw, regression[2:3, :]) + _smooth_l1(tdh, regression[3:4, :]))
    acc_reg[...] += jnp.where(positive, rl, 0.0)         # select keeps padded anchors clean

    # ---- finalize: one cross-lane reduction, emit raw partial sums for this (image, half) ----
    @pl.when(t == n_t - 1)
    def _():
        cls_sum = jnp.sum(acc_cls_a[...]) + jnp.sum(acc_cls_b[...])
        reg_sum = jnp.sum(acc_reg[...])
        pos_sum = jnp.sum(acc_pos[...])
        sub = lax.broadcasted_iota(jnp.int32, (8, 128), 0)
        out_ref[0, 0] = jnp.where(sub == 0, cls_sum,
                                  jnp.where(sub == 1, reg_sum,
                                            jnp.where(sub == 2, pos_sum, 0.0)))


def _vmem_budget_bytes():
    """(tile budget, vmem_limit_bytes) derived from the actual chip's VMEM when queryable."""
    try:
        cap = int(pltpu.get_tpu_info().vmem_capacity_bytes)
    except Exception:
        cap = 64 * 1024 * 1024            # assume the smallest (v7x-style) VMEM if unknown
    tile_budget = int(cap * 0.40)         # blocks + live temps must fit with compiler headroom
    vmem_limit = max(int(cap * 0.75), 32 * 1024 * 1024)
    return tile_budget, vmem_limit


def _pick_anchor_tile(A, C, M, budget_bytes):
    """Largest 128-multiple anchor tile whose VMEM footprint (double-buffered input blocks
    plus the live (M, TA) IoU and (TA, C) focal temporaries) fits the budget."""
    cp = _round_up(max(C, 1), 128)        # class axis is lane-padded to 128 in VMEM
    mp = _round_up(max(M, 1), 8)
    per_anchor_bytes = 4 * (2 * cp        # classification block, double-buffered
                            + 2 * cp      # clipped classification + loss0 live temps
                            + 8 * mp      # ~8 live (M, TA) IoU / one-hot / gather temps
                            + 2 * 2 * 8   # regression + anchor blocks (8-sublane padded), x2 bufs
                            + 12 * 8)     # (1, TA) rows and accumulators (8-sublane padded)
    ta = (budget_bytes // per_anchor_bytes) // 128 * 128
    return int(min(max(ta, 128), _round_up(A, 128)))


def focal_loss_pallas(classifications, regressions, anchors, annotations,
                      alpha=0.25, gamma=2.0):
    B, A, C = classifications.shape
    M = annotations.shape[1]

    tile_budget, vmem_limit = _vmem_budget_bytes()
    TA = _pick_anchor_tile(A, C, M, tile_budget)
    n_t = -(-A // TA)
    if n_t > 1 and n_t % 2 == 1:
        n_t += 1                          # even tile count -> both v7x TensorCores get work
    n_half = 2 if n_t > 1 else 1
    T = n_t // n_half
    A_pad = n_t * TA

    if A_pad != A:
        pad = A_pad - A
        # Degenerate zero anchors: IoU 0 -> never positive; classification pad clips to 1e-4
        # and contributes ~1e-12 per class; the regression branch is select-masked.
        classifications = jnp.pad(classifications, ((0, 0), (0, pad), (0, 0)))
        regressions = jnp.pad(regressions, ((0, 0), (0, pad), (0, 0)))
        anchors = jnp.pad(anchors, ((0, 0), (0, pad), (0, 0)))

    # Only the small per-anchor arrays are transposed (anchor axis -> lanes); the dominant
    # classification tensor is consumed in its natural layout (no extra HBM pass).
    reg_t = jnp.transpose(regressions, (0, 2, 1))    # (B, 4, A_pad)
    anc_t = jnp.transpose(anchors, (0, 2, 1))        # (1, 4, A_pad)
    ann_t = jnp.transpose(annotations, (0, 2, 1))    # (B, 5, M)

    kernel = functools.partial(_focal_loss_kernel, alpha=alpha, gamma=gamma)

    out = pl.pallas_call(
        kernel,
        out_shape=jax.ShapeDtypeStruct((B, n_half, 8, 128), jnp.float32),
        grid_spec=pltpu.PrefetchScalarGridSpec(
            num_scalar_prefetch=0,
            grid=(B, n_half, T),
            in_specs=[
                pl.BlockSpec((1, TA, C), lambda b, h, t: (b, h * T + t, 0)),
                pl.BlockSpec((1, 4, TA), lambda b, h, t: (b, 0, h * T + t)),
                pl.BlockSpec((1, 4, TA), lambda b, h, t: (0, 0, h * T + t)),
                pl.BlockSpec((1, M, 5), lambda b, h, t: (b, 0, 0)),
                pl.BlockSpec((1, 5, M), lambda b, h, t: (b, 0, 0)),
            ],
            out_specs=pl.BlockSpec((1, 1, 8, 128), lambda b, h, t: (b, h, 0, 0)),
            scratch_shapes=[pltpu.VMEM((1, C), jnp.float32),    # per-class cls partials (term A)
                            pltpu.VMEM((1, TA), jnp.float32),   # per-lane cls partials (term B)
                            pltpu.VMEM((1, TA), jnp.float32),   # per-lane reg partials
                            pltpu.VMEM((1, TA), jnp.float32)],  # per-lane num_pos partials
        ),
        compiler_params=pltpu.CompilerParams(
            dimension_semantics=("parallel", "parallel", "arbitrary"),
            vmem_limit_bytes=vmem_limit),
    )(classifications, reg_t, anc_t, annotations, ann_t)

    cls_sum = jnp.sum(out[:, :, 0, 0], axis=1)       # (B,)
    reg_sum = jnp.sum(out[:, :, 1, 0], axis=1)
    pos_sum = jnp.sum(out[:, :, 2, 0], axis=1)

    has_valid = jnp.any(annotations[:, :, 4] != -1.0, axis=1)
    cls_per_image = jnp.where(has_valid, cls_sum / jnp.maximum(pos_sum, 1.0), 0.0)
    reg_per_image = jnp.where(has_valid & (pos_sum > 0.0),
                              reg_sum / jnp.maximum(pos_sum * 4.0, 1.0), 0.0)
    # torch.stack(...).mean(dim=0, keepdim=True) -> shape (1,)
    return jnp.mean(cls_per_image, keepdims=True), jnp.mean(reg_per_image, keepdims=True)


# -------------------- pure numpy reference (mirrors the PyTorch code) --------------------
def _ref_focal_loss(cls_np, reg_np, anc_np, ann_np, alpha=0.25, gamma=2.0):
    B = cls_np.shape[0]
    anchor = anc_np[0]
    aw = anchor[:, 2] - anchor[:, 0]
    ah = anchor[:, 3] - anchor[:, 1]
    acx = anchor[:, 0] + 0.5 * aw
    acy = anchor[:, 1] + 0.5 * ah
    cls_losses, reg_losses = [], []
    for j in range(B):
        c = np.clip(cls_np[j], 1e-4, 1 - 1e-4)
        r = reg_np[j]
        bb = ann_np[j]
        bb = bb[bb[:, 4] != -1]
        if bb.shape[0] == 0:
            cls_losses.append(0.0)
            reg_losses.append(0.0)
            continue
        area = (bb[:, 2] - bb[:, 0]) * (bb[:, 3] - bb[:, 1])
        iw = np.minimum(anchor[:, 2:3], bb[None, :, 2]) - np.maximum(anchor[:, 0:1], bb[None, :, 0])
        ih = np.minimum(anchor[:, 3:4], bb[None, :, 3]) - np.maximum(anchor[:, 1:2], bb[None, :, 1])
        inter = np.clip(iw, 0, None) * np.clip(ih, 0, None)
        ua = np.clip((aw * ah)[:, None] + area[None, :] - inter, 1e-8, None)
        iou = inter / ua
        iou_max = iou.max(1)
        iou_arg = iou.argmax(1)
        pos = iou_max >= 0.5
        npos = pos.sum()
        assigned = bb[iou_arg]
        targets = np.ones_like(c) * -1
        targets[iou_max < 0.4, :] = 0
        targets[pos, :] = 0
        targets[pos, assigned[pos, 4].astype(np.int64)] = 1
        af = np.where(targets == 1.0, alpha, 1 - alpha)
        fw = af * np.power(np.where(targets == 1.0, 1 - c, c), gamma)
        bce = -(targets * np.log(c) + (1 - targets) * np.log(1 - c))
        cl = np.where(targets != -1.0, fw * bce, 0.0)
        cls_losses.append(cl.sum() / max(float(npos), 1.0))
        if npos > 0:
            aa = assigned[pos]
            gw = aa[:, 2] - aa[:, 0]
            gh = aa[:, 3] - aa[:, 1]
            gcx = aa[:, 0] + 0.5 * gw
            gcy = aa[:, 1] + 0.5 * gh
            gw = np.clip(gw, 1, None)
            gh = np.clip(gh, 1, None)
            t = np.stack([(gcx - acx[pos]) / aw[pos], (gcy - acy[pos]) / ah[pos],
                          np.log(gw / aw[pos]), np.log(gh / ah[pos])], axis=1)
            t = t / np.array([[0.1, 0.1, 0.2, 0.2]], dtype=np.float32)
            d = np.abs(t - r[pos])
            rl = np.where(d <= 1.0 / 9.0, 0.5 * 9.0 * d * d, d - 0.5 / 9.0)
            reg_losses.append(rl.mean())
        else:
            reg_losses.append(0.0)
    return np.float32(np.mean(cls_losses)), np.float32(np.mean(reg_losses))


if __name__ == "__main__":
    B, A, C, M = 2, 128, 8, 8
    key = jax.random.PRNGKey(0)
    k1, k2, k3, k4, k5, k6, k7, k8 = jax.random.split(key, 8)

    # anchors
    cx = jax.random.uniform(k1, (A,), jnp.float32, 16.0, 112.0)
    cy = jax.random.uniform(k2, (A,), jnp.float32, 16.0, 112.0)
    w = jax.random.uniform(k3, (A,), jnp.float32, 16.0, 48.0)
    h = jax.random.uniform(k4, (A,), jnp.float32, 16.0, 48.0)
    anchors = jnp.stack([cx - 0.5 * w, cy - 0.5 * h, cx + 0.5 * w, cy + 0.5 * h],
                        axis=1)[None]  # (1, A, 4)

    # annotations: boxes are jittered copies of some anchors -> guarantees positives
    idx = (jnp.arange(B * M) * 7) % A
    boxes = anchors[0, idx] + jax.random.uniform(k5, (B * M, 4), jnp.float32, -2.0, 2.0)
    labels = jax.random.randint(k6, (B * M, 1), 0, C).astype(jnp.float32)
    annotations = jnp.concatenate([boxes, labels], axis=1).reshape(B, M, 5)
    # padding rows (label == -1): batch 0 last 2 rows, batch 1 last 3 rows
    annotations = annotations.at[0, M - 2:, :].set(-1.0)
    annotations = annotations.at[1, M - 3:, :].set(-1.0)

    classifications = jax.random.uniform(k7, (B, A, C), jnp.float32, 0.02, 0.98)
    regressions = jax.random.normal(k8, (B, A, 4), jnp.float32) * 0.5

    cls_loss, reg_loss = focal_loss_pallas(classifications, regressions, anchors, annotations)
    cls_loss, reg_loss = jax.block_until_ready((cls_loss, reg_loss))

    ref_cls, ref_reg = _ref_focal_loss(np.asarray(classifications), np.asarray(regressions),
                                       np.asarray(anchors), np.asarray(annotations))
    assert np.allclose(np.asarray(cls_loss)[0], ref_cls, rtol=1e-3, atol=1e-5), (cls_loss, ref_cls)
    assert np.allclose(np.asarray(reg_loss)[0], ref_reg, rtol=1e-3, atol=1e-5), (reg_loss, ref_reg)

    print("KERNEL_OK")
</pallas_src>

<mosaic_0001>
module attributes {stable_mosaic.version = 11 : i64} {
  func.func @_focal_loss_kernel(%arg0: i32, %arg1: i32, %arg2: i32, %arg3: memref<1x128x8xf32, #tpu.memory_space<vmem>>, %arg4: memref<1x4x128xf32, #tpu.memory_space<vmem>>, %arg5: memref<1x4x128xf32, #tpu.memory_space<vmem>>, %arg6: memref<1x8x5xf32, #tpu.memory_space<vmem>>, %arg7: memref<1x5x8xf32, #tpu.memory_space<vmem>>, %arg8: memref<1x1x8x128xf32, #tpu.memory_space<vmem>>, %arg9: memref<1x8xf32, #tpu.memory_space<vmem>>, %arg10: memref<1x128xf32, #tpu.memory_space<vmem>>, %arg11: memref<1x128xf32, #tpu.memory_space<vmem>>, %arg12: memref<1x128xf32, #tpu.memory_space<vmem>>) attributes {dimension_semantics = [#tpu.dimension_semantics<parallel>, #tpu.dimension_semantics<parallel>, #tpu.dimension_semantics<arbitrary>], iteration_bounds = array<i64: 2, 1, 1>, scalar_prefetch = 0 : i64, scratch_operands = 4 : i64, tpu.core_type = #tpu.core_type<tc>, window_params = [{transform_indices = @transform_0, window_bounds = array<i64: 1, 128, 8>}, {transform_indices = @transform_1, window_bounds = array<i64: 1, 4, 128>}, {transform_indices = @transform_2, window_bounds = array<i64: 1, 4, 128>}, {transform_indices = @transform_3, window_bounds = array<i64: 1, 8, 5>}, {transform_indices = @transform_4, window_bounds = array<i64: 1, 5, 8>}, {transform_indices = @transform_5, window_bounds = array<i64: 1, 1, 8, 128>}]} {
    %c0_i32 = arith.constant 0 : i32
    %0 = arith.cmpi eq, %arg2, %c0_i32 : i32
    %1 = arith.extui %0 : i1 to i32
    %c0_i32_0 = arith.constant 0 : i32
    %2 = arith.cmpi ne, %1, %c0_i32_0 : i32
    scf.if %2 {
      %cst_84 = arith.constant 0.000000e+00 : f32
      %243 = vector.broadcast %cst_84 : f32 to vector<1x8xf32>
      %c0_85 = arith.constant 0 : index
      %c0_86 = arith.constant 0 : index
      %244 = vector.load %arg9[%c0_85, %c0_86] : memref<1x8xf32, #tpu.memory_space<vmem>>, vector<1x8xf32>
      tpu.vector_store %arg9[%c0_85, %c0_86], %243 {strides = array<i32>} : memref<1x8xf32, #tpu.memory_space<vmem>>, vector<1x8xf32>,
      %cst_87 = arith.constant 0.000000e+00 : f32
      %245 = vector.broadcast %cst_87 : f32 to vector<1x128xf32>
      %c0_88 = arith.constant 0 : index
      %c0_89 = arith.constant 0 : index
      %246 = vector.load %arg10[%c0_88, %c0_89] : memref<1x128xf32, #tpu.memory_space<vmem>>, vector<1x128xf32>
      tpu.vector_store %arg10[%c0_88, %c0_89], %245 {strides = array<i32>} : memref<1x128xf32, #tpu.memory_space<vmem>>, vector<1x128xf32>,
      %cst_90 = arith.constant 0.000000e+00 : f32
      %247 = vector.broadcast %cst_90 : f32 to vector<1x128xf32>
      %c0_91 = arith.constant 0 : index
      %c0_92 = arith.constant 0 : index
      %248 = vector.load %arg11[%c0_91, %c0_92] : memref<1x128xf32, #tpu.memory_space<vmem>>, vector<1x128xf32>
      tpu.vector_store %arg11[%c0_91, %c0_92], %247 {strides = array<i32>} : memref<1x128xf32, #tpu.memory_space<vmem>>, vector<1x128xf32>,
      %cst_93 = arith.constant 0.000000e+00 : f32
      %249 = vector.broadcast %cst_93 : f32 to vector<1x128xf32>
      %c0_94 = arith.constant 0 : index
      %c0_95 = arith.constant 0 : index
      %250 = vector.load %arg12[%c0_94, %c0_95] : memref<1x128xf32, #tpu.memory_space<vmem>>, vector<1x128xf32>
      tpu.vector_store %arg12[%c0_94, %c0_95], %249 {strides = array<i32>} : memref<1x128xf32, #tpu.memory_space<vmem>>, vector<1x128xf32>,
    } else {
    }
    %c0 = arith.constant 0 : index
    %c0_1 = arith.constant 0 : index
    %c0_2 = arith.constant 0 : index
    %3 = vector.load %arg3[%c0, %c0_1, %c0_2] : memref<1x128x8xf32, #tpu.memory_space<vmem>>, vector<1x128x8xf32>
    %4 = vector.shape_cast %3 : vector<1x128x8xf32> to vector<128x8xf32>
    %cst = arith.constant 9.99999974E-5 : f32
    %cst_3 = arith.constant 0.999899983 : f32
    %5 = vector.broadcast %cst : f32 to vector<128x8xf32>
    %6 = arith.maximumf %5, %4 : vector<128x8xf32>
    %7 = vector.broadcast %cst_3 : f32 to vector<128x8xf32>
    %8 = arith.minimumf %7, %6 : vector<128x8xf32>
    %c0_4 = arith.constant 0 : index
    %c0_5 = arith.constant 0 : index
    %c0_6 = arith.constant 0 : index
    %9 = vector.load %arg4[%c0_4, %c0_5, %c0_6] : memref<1x4x128xf32, #tpu.memory_space<vmem>>, vector<1x4x128xf32>
    %10 = vector.shape_cast %9 : vector<1x4x128xf32> to vector<4x128xf32>
    %c0_7 = arith.constant 0 : index
    %c0_8 = arith.constant 0 : index
    %c0_9 = arith.constant 0 : index
    %11 = vector.load %arg5[%c0_7, %c0_8, %c0_9] : memref<1x4x128xf32, #tpu.memory_space<vmem>>, vector<1x4x128xf32>
    %12 = vector.shape_cast %11 : vector<1x4x128xf32> to vector<4x128xf32>
    %c0_10 = arith.constant 0 : index
    %c0_11 = arith.constant 0 : index
    %c0_12 = arith.constant 0 : index
    %13 = vector.load %arg6[%c0_10, %c0_11, %c0_12] : memref<1x8x5xf32, #tpu.memory_space<vmem>>, vector<1x8x5xf32>
    %14 = vector.shape_cast %13 : vector<1x8x5xf32> to vector<8x5xf32>
    %c0_13 = arith.constant 0 : index
    %c0_14 = arith.constant 0 : index
    %c0_15 = arith.constant 0 : index
    %15 = vector.load %arg7[%c0_13, %c0_14, %c0_15] : memref<1x5x8xf32, #tpu.memory_space<vmem>>, vector<1x5x8xf32>
    %16 = vector.shape_cast %15 : vector<1x5x8xf32> to vector<5x8xf32>
    %17 = vector.extract_strided_slice %12 {offsets = [0, 0], sizes = [1, 128], strides = [1, 1]} : vector<4x128xf32> to vector<1x128xf32>
    %18 = vector.extract_strided_slice %12 {offsets = [1, 0], sizes = [1, 128], strides = [1, 1]} : vector<4x128xf32> to vector<1x128xf32>
    %19 = vector.extract_strided_slice %12 {offsets = [2, 0], sizes = [1, 128], strides = [1, 1]} : vector<4x128xf32> to vector<1x128xf32>
    %20 = vector.extract_strided_slice %12 {offsets = [3, 0], sizes = [1, 128], strides = [1, 1]} : vector<4x128xf32> to vector<1x128xf32>
    %21 = vector.extract_strided_slice %14 {offsets = [0, 0], sizes = [8, 1], strides = [1, 1]} : vector<8x5xf32> to vector<8x1xf32>
    %22 = vector.extract_strided_slice %14 {offsets = [0, 1], sizes = [8, 1], strides = [1, 1]} : vector<8x5xf32> to vector<8x1xf32>
    %23 = vector.extract_strided_slice %14 {offsets = [0, 2], sizes = [8, 1], strides = [1, 1]} : vector<8x5xf32> to vector<8x1xf32>
    %24 = vector.extract_strided_slice %14 {offsets = [0, 3], sizes = [8, 1], strides = [1, 1]} : vector<8x5xf32> to vector<8x1xf32>
    %25 = vector.extract_strided_slice %14 {offsets = [0, 4], sizes = [8, 1], strides = [1, 1]} : vector<8x5xf32> to vector<8x1xf32>
    %cst_16 = arith.constant -1.000000e+00 : f32
    %26 = vector.broadcast %cst_16 : f32 to vector<8x1xf32>
    %27 = arith.cmpf one, %25, %26 : vector<8x1xf32>
    %28 = arith.subf %23, %21 : vector<8x1xf32>
    %29 = arith.subf %24, %22 : vector<8x1xf32>
    %30 = arith.mulf %28, %29 : vector<8x1xf32>
    %31 = arith.subf %19, %17 : vector<1x128xf32>
    %32 = arith.subf %20, %18 : vector<1x128xf32>
    %33 = arith.mulf %31, %32 : vector<1x128xf32>
    %34 = vector.broadcast %19 : vector<1x128xf32> to vector<8x128xf32>
    %35 = vector.broadcast %23 : vector<8x1xf32> to vector<8x128xf32>
    %36 = arith.minimumf %34, %35 : vector<8x128xf32>
    %37 = vector.broadcast %17 : vector<1x128xf32> to vector<8x128xf32>
    %38 = vector.broadcast %21 : vector<8x1xf32> to vector<8x128xf32>
    %39 = arith.maximumf %37, %38 : vector<8x128xf32>
    %40 = arith.subf %36, %39 : vector<8x128xf32>
    %cst_17 = arith.constant 0.000000e+00 : f32
    %41 = vector.broadcast %cst_17 : f32 to vector<8x128xf32>
    %42 = arith.maximumf %40, %41 : vector<8x128xf32>
    %43 = vector.broadcast %20 : vector<1x128xf32> to vector<8x128xf32>
    %44 = vector.broadcast %24 : vector<8x1xf32> to vector<8x128xf32>
    %45 = arith.minimumf %43, %44 : vector<8x128xf32>
    %46 = vector.broadcast %18 : vector<1x128xf32> to vector<8x128xf32>
    %47 = vector.broadcast %22 : vector<8x1xf32> to vector<8x128xf32>
    %48 = arith.maximumf %46, %47 : vector<8x128xf32>
    %49 = arith.subf %45, %48 : vector<8x128xf32>
    %cst_18 = arith.constant 0.000000e+00 : f32
    %50 = vector.broadcast %cst_18 : f32 to vector<8x128xf32>
    %51 = arith.maximumf %49, %50 : vector<8x128xf32>
    %52 = arith.mulf %42, %51 : vector<8x128xf32>
    %53 = vector.broadcast %33 : vector<1x128xf32> to vector<8x128xf32>
    %54 = vector.broadcast %30 : vector<8x1xf32> to vector<8x128xf32>
    %55 = arith.addf %53, %54 : vector<8x128xf32>
    %56 = arith.subf %55, %52 : vector<8x128xf32>
    %cst_19 = arith.constant 9.99999993E-9 : f32
    %57 = vector.broadcast %cst_19 : f32 to vector<8x128xf32>
    %58 = arith.maximumf %56, %57 : vector<8x128xf32>
    %59 = tpu.reciprocal %58 {approx = true} : vector<8x128xf32> -> vector<8x128xf32>
    %60 = arith.mulf %58, %59 : vector<8x128xf32>
    %cst_20 = arith.constant 2.000000e+00 : f32
    %61 = vector.broadcast %cst_20 : f32 to vector<8x128xf32>
    %62 = arith.subf %61, %60 : vector<8x128xf32>
    %63 = arith.mulf %59, %62 : vector<8x128xf32>
    %64 = arith.mulf %52, %63 : vector<8x128xf32>
    %cst_21 = arith.constant -1.000000e+00 : f32
    %65 = vector.shape_cast %27 : vector<8x1xi1> to vector<8x1xi1>
    %66 = vector.broadcast %65 : vector<8x1xi1> to vector<8x128xi1>
    %67 = vector.broadcast %cst_21 : f32 to vector<8x128xf32>
    %68 = arith.select %66, %64, %67 : vector<8x128xi1>, vector<8x128xf32>
    %cst_22 = arith.constant dense<0xFF800000> : vector<128xf32>
    %69 = vector.multi_reduction <maximumf>, %68, %cst_22 [0] : vector<8x128xf32> to vector<128xf32>
    %70 = vector.shape_cast %69 : vector<128xf32> to vector<1x128xf32>
    %71 = tpu.iota {dimensions = array<i32: 0>} : vector<8x128xi32>
    %72 = vector.broadcast %70 : vector<1x128xf32> to vector<8x128xf32>
    %73 = arith.cmpf oeq, %68, %72 : vector<8x128xf32>
    %c8_i32 = arith.constant 8 : i32
    %74 = vector.broadcast %c8_i32 : i32 to vector<8x128xi32>
    %75 = arith.select %73, %71, %74 : vector<8x128xi1>, vector<8x128xi32>
    %cst_23 = arith.constant dense<2147483647> : vector<128xi32>
    %76 = vector.multi_reduction <minsi>, %75, %cst_23 [0] : vector<8x128xi32> to vector<128xi32>
    %77 = vector.shape_cast %76 : vector<128xi32> to vector<1x128xi32>
    %78 = vector.broadcast %77 : vector<1x128xi32> to vector<8x128xi32>
    %79 = arith.cmpi eq, %71, %78 : vector<8x128xi32>
    %80 = arith.extui %79 : vector<8x128xi1> to vector<8x128xi32>
    %81 = arith.sitofp %80 : vector<8x128xi32> to vector<8x128xf32>
    %cst_24 = arith.constant 5.000000e-01 : f32
    %82 = vector.broadcast %cst_24 : f32 to vector<1x128xf32>
    %83 = arith.cmpf oge, %70, %82 : vector<1x128xf32>
    %84 = arith.extui %83 : vector<1x128xi1> to vector<1x128xi32>
    %85 = arith.sitofp %84 : vector<1x128xi32> to vector<1x128xf32>
    %cst_25 = arith.constant 4.000000e-01 : f32
    %86 = vector.broadcast %cst_25 : f32 to vector<1x128xf32>
    %87 = arith.cmpf olt, %70, %86 : vector<1x128xf32>
    %88 = arith.ori %87, %83 : vector<1x128xi1>
    %89 = arith.extui %88 : vector<1x128xi1> to vector<1x128xi32>
    %90 = arith.sitofp %89 : vector<1x128xi32> to vector<1x128xf32>
    %91 = arith.mulf %8, %8 : vector<128x8xf32>
    %cst_26 = arith.constant 7.500000e-01 : f32
    %92 = vector.broadcast %cst_26 : f32 to vector<128x8xf32>
    %93 = arith.mulf %92, %91 : vector<128x8xf32>
    %cst_27 = arith.constant 1.000000e+00 : f32
    %94 = vector.broadcast %cst_27 : f32 to vector<128x8xf32>
    %95 = arith.subf %94, %8 : vector<128x8xf32>
    %96 = math.log %95 : vector<128x8xf32>
    %cst_28 = arith.constant 0.000000e+00 : f32
    %97 = vector.broadcast %cst_28 : f32 to vector<128x8xf32>
    %98 = arith.subf %97, %96 : vector<128x8xf32>
    %99 = arith.mulf %93, %98 : vector<128x8xf32>
    %c0_29 = arith.constant 0 : index
    %c0_30 = arith.constant 0 : index
    %100 = vector.load %arg9[%c0_29, %c0_30] : memref<1x8xf32, #tpu.memory_space<vmem>>, vector<1x8xf32>
    %cst_31 = arith.constant dense<0.000000e+00> : vector<1x8xf32>
    %101 = tpu.matmul %90, %99, %cst_31 {dimension_numbers = #tpu.dot_dimension_numbers<[1], [0], [0], [1], [0, 0, 1, 1], [], []>} : vector<1x128xf32>, vector<128x8xf32>, vector<1x8xf32> -> vector<1x8xf32>
    %102 = arith.addf %100, %101 : vector<1x8xf32>
    %c0_32 = arith.constant 0 : index
    %c0_33 = arith.constant 0 : index
    %103 = vector.load %arg9[%c0_32, %c0_33] : memref<1x8xf32, #tpu.memory_space<vmem>>, vector<1x8xf32>
    tpu.vector_store %arg9[%c0_32, %c0_33], %102 {strides = array<i32>} : memref<1x8xf32, #tpu.memory_space<vmem>>, vector<1x8xf32>,
    %104 = tpu.iota {dimensions = array<i32: 1>} : vector<8x8xi32>
    %105 = arith.fptosi %25 : vector<8x1xf32> to vector<8x1xi32>
    %106 = vector.broadcast %105 : vector<8x1xi32> to vector<8x8xi32>
    %107 = arith.cmpi eq, %104, %106 : vector<8x8xi32>
    %108 = arith.extui %107 : vector<8x8xi1> to vector<8x8xi32>
    %109 = arith.sitofp %108 : vector<8x8xi32> to vector<8x8xf32>
    %cst_34 = arith.constant dense<0.000000e+00> : vector<8x128xf32>
    %110 = tpu.matmul %109, %8, %cst_34 {dimension_numbers = #tpu.dot_dimension_numbers<[1], [1], [0], [0], [0, 0, 1, 0], [], []>} : vector<8x8xf32>, vector<128x8xf32>, vector<8x128xf32> -> vector<8x128xf32>
    %111 = arith.mulf %81, %110 : vector<8x128xf32>
    %cst_35 = arith.constant dense<0.000000e+00> : vector<128xf32>
    %112 = vector.multi_reduction <add>, %111, %cst_35 [0] : vector<8x128xf32> to vector<128xf32>
    %113 = vector.shape_cast %112 : vector<128xf32> to vector<1x128xf32>
    %cst_36 = arith.constant 1.000000e+00 : f32
    %114 = vector.broadcast %cst_36 : f32 to vector<1x128xf32>
    %115 = arith.subf %114, %113 : vector<1x128xf32>
    %cst_37 = arith.constant 1.000000e+00 : f32
    %116 = vector.broadcast %cst_37 : f32 to vector<1x128xf32>
    %117 = arith.subf %116, %113 : vector<1x128xf32>
    %118 = arith.mulf %115, %117 : vector<1x128xf32>
    %119 = arith.mulf %113, %113 : vector<1x128xf32>
    %cst_38 = arith.constant 2.500000e-01 : f32
    %120 = vector.broadcast %cst_38 : f32 to vector<1x128xf32>
    %121 = arith.mulf %120, %118 : vector<1x128xf32>
    %122 = math.log %113 : vector<1x128xf32>
    %cst_39 = arith.constant 0.000000e+00 : f32
    %123 = vector.broadcast %cst_39 : f32 to vector<1x128xf32>
    %124 = arith.subf %123, %122 : vector<1x128xf32>
    %125 = arith.mulf %121, %124 : vector<1x128xf32>
    %cst_40 = arith.constant 7.500000e-01 : f32
    %126 = vector.broadcast %cst_40 : f32 to vector<1x128xf32>
    %127 = arith.mulf %126, %119 : vector<1x128xf32>
    %cst_41 = arith.constant 1.000000e+00 : f32
    %128 = vector.broadcast %cst_41 : f32 to vector<1x128xf32>
    %129 = arith.subf %128, %113 : vector<1x128xf32>
    %130 = math.log %129 : vector<1x128xf32>
    %cst_42 = arith.constant 0.000000e+00 : f32
    %131 = vector.broadcast %cst_42 : f32 to vector<1x128xf32>
    %132 = arith.subf %131, %130 : vector<1x128xf32>
    %133 = arith.mulf %127, %132 : vector<1x128xf32>
    %c0_43 = arith.constant 0 : index
    %c0_44 = arith.constant 0 : index
    %134 = vector.load %arg10[%c0_43, %c0_44] : memref<1x128xf32, #tpu.memory_space<vmem>>, vector<1x128xf32>
    %135 = arith.subf %125, %133 : vector<1x128xf32>
    %cst_45 = arith.constant 0.000000e+00 : f32
    %136 = vector.broadcast %cst_45 : f32 to vector<1x128xf32>
    %137 = arith.select %83, %135, %136 : vector<1x128xi1>, vector<1x128xf32>
    %138 = arith.addf %134, %137 : vector<1x128xf32>
    %c0_46 = arith.constant 0 : index
    %c0_47 = arith.constant 0 : index
    %139 = vector.load %arg10[%c0_46, %c0_47] : memref<1x128xf32, #tpu.memory_space<vmem>>, vector<1x128xf32>
    tpu.vector_store %arg10[%c0_46, %c0_47], %138 {strides = array<i32>} : memref<1x128xf32, #tpu.memory_space<vmem>>, vector<1x128xf32>,
    %c0_48 = arith.constant 0 : index
    %c0_49 = arith.constant 0 : index
    %140 = vector.load %arg12[%c0_48, %c0_49] : memref<1x128xf32, #tpu.memory_space<vmem>>, vector<1x128xf32>
    %141 = arith.addf %140, %85 : vector<1x128xf32>
    %c0_50 = arith.constant 0 : index
    %c0_51 = arith.constant 0 : index
    %142 = vector.load %arg12[%c0_50, %c0_51] : memref<1x128xf32, #tpu.memory_space<vmem>>, vector<1x128xf32>
    tpu.vector_store %arg12[%c0_50, %c0_51], %141 {strides = array<i32>} : memref<1x128xf32, #tpu.memory_space<vmem>>, vector<1x128xf32>,
    %cst_52 = arith.constant dense<0.000000e+00> : vector<5x128xf32>
    %143 = tpu.matmul %16, %81, %cst_52 {dimension_numbers = #tpu.dot_dimension_numbers<[1], [0], [0], [1], [0, 0, 1, 1], [], []>} : vector<5x8xf32>, vector<8x128xf32>, vector<5x128xf32> -> vector<5x128xf32>
    %144 = vector.extract_strided_slice %143 {offsets = [0, 0], sizes = [1, 128], strides = [1, 1]} : vector<5x128xf32> to vector<1x128xf32>
    %145 = vector.extract_strided_slice %143 {offsets = [1, 0], sizes = [1, 128], strides = [1, 1]} : vector<5x128xf32> to vector<1x128xf32>
    %146 = vector.extract_strided_slice %143 {offsets = [2, 0], sizes = [1, 128], strides = [1, 1]} : vector<5x128xf32> to vector<1x128xf32>
    %147 = vector.extract_strided_slice %143 {offsets = [3, 0], sizes = [1, 128], strides = [1, 1]} : vector<5x128xf32> to vector<1x128xf32>
    %148 = arith.subf %19, %17 : vector<1x128xf32>
    %149 = arith.subf %20, %18 : vector<1x128xf32>
    %cst_53 = arith.constant 5.000000e-01 : f32
    %150 = vector.broadcast %cst_53 : f32 to vector<1x128xf32>
    %151 = arith.mulf %150, %148 : vector<1x128xf32>
    %152 = arith.addf %17, %151 : vector<1x128xf32>
    %cst_54 = arith.constant 5.000000e-01 : f32
    %153 = vector.broadcast %cst_54 : f32 to vector<1x128xf32>
    %154 = arith.mulf %153, %149 : vector<1x128xf32>
    %155 = arith.addf %18, %154 : vector<1x128xf32>
    %156 = arith.subf %146, %144 : vector<1x128xf32>
    %157 = arith.subf %147, %145 : vector<1x128xf32>
    %cst_55 = arith.constant 5.000000e-01 : f32
    %158 = vector.broadcast %cst_55 : f32 to vector<1x128xf32>
    %159 = arith.mulf %158, %156 : vector<1x128xf32>
    %160 = arith.addf %144, %159 : vector<1x128xf32>
    %cst_56 = arith.constant 5.000000e-01 : f32
    %161 = vector.broadcast %cst_56 : f32 to vector<1x128xf32>
    %162 = arith.mulf %161, %157 : vector<1x128xf32>
    %163 = arith.addf %145, %162 : vector<1x128xf32>
    %cst_57 = arith.constant 1.000000e+00 : f32
    %164 = vector.broadcast %cst_57 : f32 to vector<1x128xf32>
    %165 = arith.maximumf %156, %164 : vector<1x128xf32>
    %cst_58 = arith.constant 1.000000e+00 : f32
    %166 = vector.broadcast %cst_58 : f32 to vector<1x128xf32>
    %167 = arith.maximumf %157, %166 : vector<1x128xf32>
    %cst_59 = arith.constant 1.000000e+00 : f32
    %168 = vector.broadcast %cst_59 : f32 to vector<1x128xf32>
    %169 = arith.divf %168, %148 : vector<1x128xf32>
    %cst_60 = arith.constant 1.000000e+00 : f32
    %170 = vector.broadcast %cst_60 : f32 to vector<1x128xf32>
    %171 = arith.divf %170, %149 : vector<1x128xf32>
    %172 = arith.subf %160, %152 : vector<1x128xf32>
    %173 = arith.mulf %172, %169 : vector<1x128xf32>
    %cst_61 = arith.constant 1.000000e+01 : f32
    %174 = vector.broadcast %cst_61 : f32 to vector<1x128xf32>
    %175 = arith.mulf %173, %174 : vector<1x128xf32>
    %176 = arith.subf %163, %155 : vector<1x128xf32>
    %177 = arith.mulf %176, %171 : vector<1x128xf32>
    %cst_62 = arith.constant 1.000000e+01 : f32
    %178 = vector.broadcast %cst_62 : f32 to vector<1x128xf32>
    %179 = arith.mulf %177, %178 : vector<1x128xf32>
    %180 = arith.mulf %165, %169 : vector<1x128xf32>
    %181 = math.log %180 : vector<1x128xf32>
    %cst_63 = arith.constant 5.000000e+00 : f32
    %182 = vector.broadcast %cst_63 : f32 to vector<1x128xf32>
    %183 = arith.mulf %181, %182 : vector<1x128xf32>
    %184 = arith.mulf %167, %171 : vector<1x128xf32>
    %185 = math.log %184 : vector<1x128xf32>
    %cst_64 = arith.constant 5.000000e+00 : f32
    %186 = vector.broadcast %cst_64 : f32 to vector<1x128xf32>
    %187 = arith.mulf %185, %186 : vector<1x128xf32>
    %188 = vector.extract_strided_slice %10 {offsets = [0, 0], sizes = [1, 128], strides = [1, 1]} : vector<4x128xf32> to vector<1x128xf32>
    %189 = arith.subf %175, %188 : vector<1x128xf32>
    %190 = math.absf %189 : vector<1x128xf32>
    %cst_65 = arith.constant 0.111111112 : f32
    %191 = vector.broadcast %cst_65 : f32 to vector<1x128xf32>
    %192 = arith.cmpf ole, %190, %191 : vector<1x128xf32>
    %cst_66 = arith.constant 4.500000e+00 : f32
    %193 = vector.broadcast %cst_66 : f32 to vector<1x128xf32>
    %194 = arith.mulf %193, %190 : vector<1x128xf32>
    %195 = arith.mulf %194, %190 : vector<1x128xf32>
    %cst_67 = arith.constant 0.055555556 : f32
    %196 = vector.broadcast %cst_67 : f32 to vector<1x128xf32>
    %197 = arith.subf %190, %196 : vector<1x128xf32>
    %198 = arith.select %192, %195, %197 : vector<1x128xi1>, vector<1x128xf32>
    %199 = vector.extract_strided_slice %10 {offsets = [1, 0], sizes = [1, 128], strides = [1, 1]} : vector<4x128xf32> to vector<1x128xf32>
    %200 = arith.subf %179, %199 : vector<1x128xf32>
    %201 = math.absf %200 : vector<1x128xf32>
    %cst_68 = arith.constant 0.111111112 : f32
    %202 = vector.broadcast %cst_68 : f32 to vector<1x128xf32>
    %203 = arith.cmpf ole, %201, %202 : vector<1x128xf32>
    %cst_69 = arith.constant 4.500000e+00 : f32
    %204 = vector.broadcast %cst_69 : f32 to vector<1x128xf32>
    %205 = arith.mulf %204, %201 : vector<1x128xf32>
    %206 = arith.mulf %205, %201 : vector<1x128xf32>
    %cst_70 = arith.constant 0.055555556 : f32
    %207 = vector.broadcast %cst_70 : f32 to vector<1x128xf32>
    %208 = arith.subf %201, %207 : vector<1x128xf32>
    %209 = arith.select %203, %206, %208 : vector<1x128xi1>, vector<1x128xf32>
    %210 = arith.addf %198, %209 : vector<1x128xf32>
    %211 = vector.extract_strided_slice %10 {offsets = [2, 0], sizes = [1, 128], strides = [1, 1]} : vector<4x128xf32> to vector<1x128xf32>
    %212 = arith.subf %183, %211 : vector<1x128xf32>
    %213 = math.absf %212 : vector<1x128xf32>
    %cst_71 = arith.constant 0.111111112 : f32
    %214 = vector.broadcast %cst_71 : f32 to vector<1x128xf32>
    %215 = arith.cmpf ole, %213, %214 : vector<1x128xf32>
    %cst_72 = arith.constant 4.500000e+00 : f32
    %216 = vector.broadcast %cst_72 : f32 to vector<1x128xf32>
    %217 = arith.mulf %216, %213 : vector<1x128xf32>
    %218 = arith.mulf %217, %213 : vector<1x128xf32>
    %cst_73 = arith.constant 0.055555556 : f32
    %219 = vector.broadcast %cst_73 : f32 to vector<1x128xf32>
    %220 = arith.subf %213, %219 : vector<1x128xf32>
    %221 = arith.select %215, %218, %220 : vector<1x128xi1>, vector<1x128xf32>
    %222 = arith.addf %210, %221 : vector<1x128xf32>
    %223 = vector.extract_strided_slice %10 {offsets = [3, 0], sizes = [1, 128], strides = [1, 1]} : vector<4x128xf32> to vector<1x128xf32>
    %224 = arith.subf %187, %223 : vector<1x128xf32>
    %225 = math.absf %224 : vector<1x128xf32>
    %cst_74 = arith.constant 0.111111112 : f32
    %226 = vector.broadcast %cst_74 : f32 to vector<1x128xf32>
    %227 = arith.cmpf ole, %225, %226 : vector<1x128xf32>
    %cst_75 = arith.constant 4.500000e+00 : f32
    %228 = vector.broadcast %cst_75 : f32 to vector<1x128xf32>
    %229 = arith.mulf %228, %225 : vector<1x128xf32>
    %230 = arith.mulf %229, %225 : vector<1x128xf32>
    %cst_76 = arith.constant 0.055555556 : f32
    %231 = vector.broadcast %cst_76 : f32 to vector<1x128xf32>
    %232 = arith.subf %225, %231 : vector<1x128xf32>
    %233 = arith.select %227, %230, %232 : vector<1x128xi1>, vector<1x128xf32>
    %234 = arith.addf %222, %233 : vector<1x128xf32>
    %c0_77 = arith.constant 0 : index
    %c0_78 = arith.constant 0 : index
    %235 = vector.load %arg11[%c0_77, %c0_78] : memref<1x128xf32, #tpu.memory_space<vmem>>, vector<1x128xf32>
    %cst_79 = arith.constant 0.000000e+00 : f32
    %236 = vector.broadcast %cst_79 : f32 to vector<1x128xf32>
    %237 = arith.select %83, %234, %236 : vector<1x128xi1>, vector<1x128xf32>
    %238 = arith.addf %235, %237 : vector<1x128xf32>
    %c0_80 = arith.constant 0 : index
    %c0_81 = arith.constant 0 : index
    %239 = vector.load %arg11[%c0_80, %c0_81] : memref<1x128xf32, #tpu.memory_space<vmem>>, vector<1x128xf32>
    tpu.vector_store %arg11[%c0_80, %c0_81], %238 {strides = array<i32>} : memref<1x128xf32, #tpu.memory_space<vmem>>, vector<1x128xf32>,
    %c0_i32_82 = arith.constant 0 : i32
    %240 = arith.cmpi eq, %arg2, %c0_i32_82 : i32
    %241 = arith.extui %240 : i1 to i32
    %c0_i32_83 = arith.constant 0 : i32
    %242 = arith.cmpi ne, %241, %c0_i32_83 : i32
    scf.if %242 {
      %c0_84 = arith.constant 0 : index
      %c0_85 = arith.constant 0 : index
      %243 = vector.load %arg9[%c0_84, %c0_85] : memref<1x8xf32, #tpu.memory_space<vmem>>, vector<1x8xf32>
      %244 = vector.shape_cast %243 : vector<1x8xf32> to vector<1x1x8xf32>
      %cst_86 = arith.constant dense<0.000000e+00> : vector<1xf32>
      %245 = vector.multi_reduction <add>, %244, %cst_86 [1, 2] : vector<1x1x8xf32> to vector<1xf32>
      %246 = vector.shape_cast %245 : vector<1xf32> to vector<1x1x1xf32>
      %247 = vector.extract %246[0, 0, 0] : f32 from vector<1x1x1xf32>
      %c0_87 = arith.constant 0 : index
      %c0_88 = arith.constant 0 : index
      %248 = vector.load %arg10[%c0_87, %c0_88] : memref<1x128xf32, #tpu.memory_space<vmem>>, vector<1x128xf32>
      %249 = vector.shape_cast %248 : vector<1x128xf32> to vector<1x1x128xf32>
      %cst_89 = arith.constant dense<0.000000e+00> : vector<1xf32>
      %250 = vector.multi_reduction <add>, %249, %cst_89 [1, 2] : vector<1x1x128xf32> to vector<1xf32>
      %251 = vector.shape_cast %250 : vector<1xf32> to vector<1x1x1xf32>
      %252 = vector.extract %251[0, 0, 0] : f32 from vector<1x1x1xf32>
      %253 = arith.addf %247, %252 : f32
      %c0_90 = arith.constant 0 : index
      %c0_91 = arith.constant 0 : index
      %254 = vector.load %arg11[%c0_90, %c0_91] : memref<1x128xf32, #tpu.memory_space<vmem>>, vector<1x128xf32>
      %255 = vector.shape_cast %254 : vector<1x128xf32> to vector<1x1x128xf32>
      %cst_92 = arith.constant dense<0.000000e+00> : vector<1xf32>
      %256 = vector.multi_reduction <add>, %255, %cst_92 [1, 2] : vector<1x1x128xf32> to vector<1xf32>
      %257 = vector.shape_cast %256 : vector<1xf32> to vector<1x1x1xf32>
      %258 = vector.extract %257[0, 0, 0] : f32 from vector<1x1x1xf32>
      %c0_93 = arith.constant 0 : index
      %c0_94 = arith.constant 0 : index
      %259 = vector.load %arg12[%c0_93, %c0_94] : memref<1x128xf32, #tpu.memory_space<vmem>>, vector<1x128xf32>
      %260 = vector.shape_cast %259 : vector<1x128xf32> to vector<1x1x128xf32>
      %cst_95 = arith.constant dense<0.000000e+00> : vector<1xf32>
      %261 = vector.multi_reduction <add>, %260, %cst_95 [1, 2] : vector<1x1x128xf32> to vector<1xf32>
      %262 = vector.shape_cast %261 : vector<1xf32> to vector<1x1x1xf32>
      %263 = vector.extract %262[0, 0, 0] : f32 from vector<1x1x1xf32>
      %264 = tpu.iota {dimensions = array<i32: 0>} : vector<8x128xi32>
      %c0_i32_96 = arith.constant 0 : i32
      %265 = vector.broadcast %c0_i32_96 : i32 to vector<8x128xi32>
      %266 = arith.cmpi eq, %264, %265 : vector<8x128xi32>
      %c1_i32 = arith.constant 1 : i32
      %267 = vector.broadcast %c1_i32 : i32 to vector<8x128xi32>
      %268 = arith.cmpi eq, %264, %267 : vector<8x128xi32>
      %c2_i32 = arith.constant 2 : i32
      %269 = vector.broadcast %c2_i32 : i32 to vector<8x128xi32>
      %270 = arith.cmpi eq, %264, %269 : vector<8x128xi32>
      %cst_97 = arith.constant 0.000000e+00 : f32
      %271 = vector.broadcast %263 : f32 to vector<8x128xf32>
      %272 = vector.broadcast %cst_97 : f32 to vector<8x128xf32>
      %273 = arith.select %270, %271, %272 : vector<8x128xi1>, vector<8x128xf32>
      %274 = vector.broadcast %258 : f32 to vector<8x128xf32>
      %275 = arith.select %268, %274, %273 : vector<8x128xi1>, vector<8x128xf32>
      %276 = vector.broadcast %253 : f32 to vector<8x128xf32>
      %277 = arith.select %266, %276, %275 : vector<8x128xi1>, vector<8x128xf32>
      %c0_98 = arith.constant 0 : index
      %c0_99 = arith.constant 0 : index
      %c0_100 = arith.constant 0 : index
      %c0_101 = arith.constant 0 : index
      %278 = vector.load %arg8[%c0_98, %c0_99, %c0_100, %c0_101] : memref<1x1x8x128xf32, #tpu.memory_space<vmem>>, vector<1x1x8x128xf32>
      %279 = vector.shape_cast %278 : vector<1x1x8x128xf32> to vector<8x128xf32>
      %280 = vector.shape_cast %277 : vector<8x128xf32> to vector<1x1x8x128xf32>
      tpu.vector_store %arg8[%c0_98, %c0_99, %c0_100, %c0_101], %280 {strides = array<i32>} : memref<1x1x8x128xf32, #tpu.memory_space<vmem>>, vector<1x1x8x128xf32>,
    } else {
    }
    return
  }
  func.func @transform_0(%arg0: i32, %arg1: i32, %arg2: i32) -> (i32, i32, i32) {
    %c1_i32 = arith.constant 1 : i32
    %0 = arith.muli %arg1, %c1_i32 : i32
    %1 = arith.addi %0, %arg2 : i32
    %c0_i32 = arith.constant 0 : i32
    %c0_i32_0 = arith.constant 0 : i32
    return %arg0, %1, %c0_i32 : i32, i32, i32
  }
  func.func @transform_1(%arg0: i32, %arg1: i32, %arg2: i32) -> (i32, i32, i32) {
    %c1_i32 = arith.constant 1 : i32
    %0 = arith.muli %arg1, %c1_i32 : i32
    %1 = arith.addi %0, %arg2 : i32
    %c0_i32 = arith.constant 0 : i32
    %c0_i32_0 = arith.constant 0 : i32
    return %arg0, %c0_i32, %1 : i32, i32, i32
  }
  func.func @transform_2(%arg0: i32, %arg1: i32, %arg2: i32) -> (i32, i32, i32) {
    %c1_i32 = arith.constant 1 : i32
    %0 = arith.muli %arg1, %c1_i32 : i32
    %1 = arith.addi %0, %arg2 : i32
    %c0_i32 = arith.constant 0 : i32
    %c0_i32_0 = arith.constant 0 : i32
    %c0_i32_1 = arith.constant 0 : i32
    return %c0_i32, %c0_i32_0, %1 : i32, i32, i32
  }
  func.func @transform_3(%arg0: i32, %arg1: i32, %arg2: i32) -> (i32, i32, i32) {
    %c0_i32 = arith.constant 0 : i32
    %c0_i32_0 = arith.constant 0 : i32
    %c0_i32_1 = arith.constant 0 : i32
    return %arg0, %c0_i32, %c0_i32_0 : i32, i32, i32
  }
  func.func @transform_4(%arg0: i32, %arg1: i32, %arg2: i32) -> (i32, i32, i32) {
    %c0_i32 = arith.constant 0 : i32
    %c0_i32_0 = arith.constant 0 : i32
    %c0_i32_1 = arith.constant 0 : i32
    return %arg0, %c0_i32, %c0_i32_0 : i32, i32, i32
  }
  func.func @transform_5(%arg0: i32, %arg1: i32, %arg2: i32) -> (i32, i32, i32, i32) {
    %c0_i32 = arith.constant 0 : i32
    %c0_i32_0 = arith.constant 0 : i32
    %c0_i32_1 = arith.constant 0 : i32
    return %arg0, %arg1, %c0_i32, %c0_i32_0 : i32, i32, i32, i32
  }
}

</mosaic_0001>

<llo_original>
// kernel: tpu_custom_call.1
$region0: #{tpu_custom_call.1}
  #allocation0 [shape = 'u32[]', space=smem, size = 0x4, offset = 0x4, fixed_abs, tag = 'smem constant byte address 0x4 - core index']
  #allocation1 [shape = 'u32[144,128]{1,0:T(1,128)}', space=vmem, size = 0x12000, scoped, tag = 'internal scratch']
  #allocation2 [shape = 'f32[1,8]{1,0:T(1,128)}', space=vmem, size = 0x200, scoped, tag = 'scratch operand']
  #allocation3 [shape = 'f32[1,128]{1,0:T(1,128)}', space=vmem, size = 0x200, scoped, tag = 'scratch operand']
  #allocation4 [shape = 'f32[1,128]{1,0:T(1,128)}', space=vmem, size = 0x200, scoped, tag = 'scratch operand']
  #allocation5 [shape = 'f32[1,128]{1,0:T(1,128)}', space=vmem, size = 0x200, scoped, tag = 'scratch operand']
  %s0 = inlined_call_operand.vmem [shape: f32[2,128,8], index: 0, kind: input, shape index: {}]
  %s1 = inlined_call_operand.vmem [shape: f32[2,4,128], index: 1, kind: input, shape index: {}]
  %s2 = inlined_call_operand.vmem [shape: f32[1,4,128], index: 2, kind: input, shape index: {}]
  %s3 = inlined_call_operand.vmem [shape: f32[2,8,5], index: 3, kind: input, shape index: {}]
  %s4 = inlined_call_operand.vmem [shape: f32[2,5,8], index: 4, kind: input, shape index: {}]
  %s5 = inlined_call_operand.hbm [shape: f32[2,1,8,128], index: 5, kind: output, shape index: {}]
  %s6 = sld [smem:[#allocation0]]
  $region61: #{tpu_custom_call.1} parent=0
    _
  %s8 = ssub.s32 1, %s6
  %s9 = scalar_select 0, %s8, %s6
  $region1: #{tpu_custom_call.1} parent=0
    #allocation6 [shape = 'u8[8192]{0}', space=vmem, size = 0x2000, scoped, tag = 'output window, operand 0']
    #allocation7 [shape = 's32[2]{0}', space=sflag, size = 0x8, scoped, tag = 'scoped memory for tpu_custom_call.1']
    %10 = vsyncpa [#allocation7], 0
    %s11 = scalar_lea.sflag [#allocation7], 1
    %12 = vsyncpa %s11, 0
    loop: start=0, step=1, limit=4
    $region2: #{tpu_custom_call.1} parent=1 // loop_pre_header
      _
    $region3: #{tpu_custom_call.1} parent=1 // loop_header
      %s14 = sphi 0, %s18
      %p15 = scmp.ge.s32.totalorder %s14, 4
      %s21 = sphi 0, %s40
      %s22 = sphi 0, %s36
      %s23 = sphi 0, %s32
      %s24 = sphi 0, %s21
      %s25 = sphi 0, %s22
      %s26 = sphi 0, %s23
      %s27 = sphi 0, %s24
      %s28 = sphi 0, %s25
      %s29 = sphi 0, %s26
      %s47 = sphi 0, %s49
      %s50 = sphi 0, %s47
      %s51 = sphi 0, %s50
      %s67 = sphi 0, %s51
      %s77 = sphi 0, %s79
      %s80 = sphi 0, %s77
      %s81 = sphi 0, %s80
      %s97 = sphi 0, %s81
      %s105 = sphi 0, %s107
      %s108 = sphi 0, %s105
      %s109 = sphi 0, %s108
      %s125 = sphi 0, %s109
      %s131 = sphi 0, %s133
      %s134 = sphi 0, %s131
      %s135 = sphi 0, %s134
      %s151 = sphi 0, %s135
      %s157 = sphi 0, %s159
      %s160 = sphi 0, %s157
      %s161 = sphi 0, %s160
      %s177 = sphi 0, %s161
      %s185 = sphi 0, %s187
      %s188 = sphi 0, %s185
      %s189 = sphi 0, %s188
      %s205 = sphi 0, %s189
    $region4: #{tpu_custom_call.1} parent=1 // loop_header_branch
      %17 = sbr.rel (%p15) target = $region8
    $region5: #{tpu_custom_call.1} parent=1 // loop_body
      %s19 = ssub.s32 %s14, 1
      %s20 = ssub.s32 %s14, 2
      %s30 = sadd.s32 1, %s23
      %p31 = scmp.ge.s32.totalorder %s30, 1
      %s32 = scalar_select %p31, 0, %s30
      %s33 = sadd.s32 1, %s22
      %s34 = scalar_select %p31, %s33, %s22
      %p35 = scmp.ge.s32.totalorder %s34, 1
      %s36 = scalar_select %p35, 0, %s34
      %s37 = sadd.s32 1, %s21
      %s38 = scalar_select %p35, %s37, %s21
      %p39 = scmp.ge.s32.totalorder %s38, 2
      %s40 = scalar_select %p39, 0, %s38
      %s41 = sadd.s32 %s22, %s23
      %s42 = sadd.s32 %s36, %s32
      %s43 = ssub.s32 %s21, %s40
      %s44 = ssub.s32 %s41, %s42
      %s45 = sor.u32 %s43, %s44
      %p46 = scmp.eq.s32.totalorder %s45, 0
      %s48 = sadd.s32 %s47, 1
      %s49 = scalar_select %p46, %s47, %s48
      %p52 = pneg %p46
      %p53 = scmp.eq.s32.totalorder %s14, 1
      %p54 = por %p52, %p53
      %p55 = scmp.ne.s32.totalorder %s47, %s50
      %p56 = scmp.eq.s32.totalorder %s14, 0
      %p57 = por %p55, %p56
      %p58 = scmp.ne.s32.totalorder %s47, %s50
      %p59 = scmp.eq.s32.totalorder %s19, 1
      %p60 = por %p58, %p59
      %p61 = scmp.ne.s32.totalorder %s50, %s51
      %p62 = scmp.eq.s32.totalorder %s19, 0
      %p63 = por %p61, %p62
      %p64 = scmp.ne.s32.totalorder %s50, %s51
      %p65 = scmp.eq.s32.totalorder %s20, 1
      %p66 = por %p64, %p65
      %p68 = scmp.ne.s32.totalorder %s51, %s67
      %p69 = scmp.eq.s32.totalorder %s20, 0
      %p70 = por %p68, %p69
      %s71 = sadd.s32 %s22, %s23
      %s72 = sadd.s32 %s36, %s32
      %s73 = ssub.s32 %s21, %s40
      %s74 = ssub.s32 %s71, %s72
      %s75 = sor.u32 %s73, %s74
      %p76 = scmp.eq.s32.totalorder %s75, 0
      %s78 = sadd.s32 %s77, 1
      %s79 = scalar_select %p76, %s77, %s78
      %p82 = pneg %p76
      %p83 = scmp.eq.s32.totalorder %s14, 1
      %p84 = por %p82, %p83
      %p85 = scmp.ne.s32.totalorder %s77, %s80
      %p86 = scmp.eq.s32.totalorder %s14, 0
      %p87 = por %p85, %p86
      %p88 = scmp.ne.s32.totalorder %s77, %s80
      %p89 = scmp.eq.s32.totalorder %s19, 1
      %p90 = por %p88, %p89
      %p91 = scmp.ne.s32.totalorder %s80, %s81
      %p92 = scmp.eq.s32.totalorder %s19, 0
      %p93 = por %p91, %p92
      %p94 = scmp.ne.s32.totalorder %s80, %s81
      %p95 = scmp.eq.s32.totalorder %s20, 1
      %p96 = por %p94, %p95
      %p98 = scmp.ne.s32.totalorder %s81, %s97
      %p99 = scmp.eq.s32.totalorder %s20, 0
      %p100 = por %p98, %p99
      %s101 = sadd.s32 %s22, %s23
      %s102 = sadd.s32 %s36, %s32
      %s103 = ssub.s32 %s101, %s102
      %p104 = scmp.eq.s32.totalorder %s103, 0
      %s106 = sadd.s32 %s105, 1
      %s107 = scalar_select %p104, %s105, %s106
      %p110 = pneg %p104
      %p111 = scmp.eq.s32.totalorder %s14, 1
      %p112 = por %p110, %p111
      %p113 = scmp.ne.s32.totalorder %s105, %s108
      %p114 = scmp.eq.s32.totalorder %s14, 0
      %p115 = por %p113, %p114
      %p116 = scmp.ne.s32.totalorder %s105, %s108
      %p117 = scmp.eq.s32.totalorder %s19, 1
      %p118 = por %p116, %p117
      %p119 = scmp.ne.s32.totalorder %s108, %s109
      %p120 = scmp.eq.s32.totalorder %s19, 0
      %p121 = por %p119, %p120
      %p122 = scmp.ne.s32.totalorder %s108, %s109
      %p123 = scmp.eq.s32.totalorder %s20, 1
      %p124 = por %p122, %p123
      %p126 = scmp.ne.s32.totalorder %s109, %s125
      %p127 = scmp.eq.s32.totalorder %s20, 0
      %p128 = por %p126, %p127
      %s129 = ssub.s32 %s21, %s40
      %p130 = scmp.eq.s32.totalorder %s129, 0
      %s132 = sadd.s32 %s131, 1
      %s133 = scalar_select %p130, %s131, %s132
      %p136 = pneg %p130
      %p137 = scmp.eq.s32.totalorder %s14, 1
      %p138 = por %p136, %p137
      %p139 = scmp.ne.s32.totalorder %s131, %s134
      %p140 = scmp.eq.s32.totalorder %s14, 0
      %p141 = por %p139, %p140
      %p142 = scmp.ne.s32.totalorder %s131, %s134
      %p143 = scmp.eq.s32.totalorder %s19, 1
      %p144 = por %p142, %p143
      %p145 = scmp.ne.s32.totalorder %s134, %s135
      %p146 = scmp.eq.s32.totalorder %s19, 0
      %p147 = por %p145, %p146
      %p148 = scmp.ne.s32.totalorder %s134, %s135
      %p149 = scmp.eq.s32.totalorder %s20, 1
      %p150 = por %p148, %p149
      %p152 = scmp.ne.s32.totalorder %s135, %s151
      %p153 = scmp.eq.s32.totalorder %s20, 0
      %p154 = por %p152, %p153
      %s155 = ssub.s32 %s21, %s40
      %p156 = scmp.eq.s32.totalorder %s155, 0
      %s158 = sadd.s32 %s157, 1
      %s159 = scalar_select %p156, %s157, %s158
      %p162 = pneg %p156
      %p163 = scmp.eq.s32.totalorder %s14, 1
      %p164 = por %p162, %p163
      %p165 = scmp.ne.s32.totalorder %s157, %s160
      %p166 = scmp.eq.s32.totalorder %s14, 0
      %p167 = por %p165, %p166
      %p168 = scmp.ne.s32.totalorder %s157, %s160
      %p169 = scmp.eq.s32.totalorder %s19, 1
      %p170 = por %p168, %p169
      %p171 = scmp.ne.s32.totalorder %s160, %s161
      %p172 = scmp.eq.s32.totalorder %s19, 0
      %p173 = por %p171, %p172
      %p174 = scmp.ne.s32.totalorder %s160, %s161
      %p175 = scmp.eq.s32.totalorder %s20, 1
      %p176 = por %p174, %p175
      %p178 = scmp.ne.s32.totalorder %s161, %s177
      %p179 = scmp.eq.s32.totalorder %s20, 0
      %p180 = por %p178, %p179
      %s181 = ssub.s32 %s21, %s40
      %s182 = ssub.s32 %s22, %s36
      %s183 = sor.u32 %s181, %s182
      %p184 = scmp.eq.s32.totalorder %s183, 0
      %s186 = sadd.s32 %s185, 1
      %s187 = scalar_select %p184, %s185, %s186
      %p190 = pneg %p184
      %p191 = scmp.eq.s32.totalorder %s14, 1
      %p192 = por %p190, %p191
      %p193 = scmp.ne.s32.totalorder %s185, %s188
      %p194 = scmp.eq.s32.totalorder %s14, 0
      %p195 = por %p193, %p194
      %p196 = scmp.ne.s32.totalorder %s185, %s188
      %p197 = scmp.eq.s32.totalorder %s19, 1
      %p198 = por %p196, %p197
      %p199 = scmp.ne.s32.totalorder %s188, %s189
      %p200 = scmp.eq.s32.totalorder %s19, 0
      %p201 = por %p199, %p200
      %p202 = scmp.ne.s32.totalorder %s188, %s189
      %p203 = scmp.eq.s32.totalorder %s20, 1
      %p204 = por %p202, %p203
      %p206 = scmp.ne.s32.totalorder %s189, %s205
      %p207 = scmp.eq.s32.totalorder %s20, 0
      %p208 = por %p206, %p207
      %p209 = scmp.le.s32.totalorder 1, %s14
      %p210 = scmp.lt.s32.totalorder %s14, 3
      %p211 = pnand %p209, %p210
      %p212 = pneg %p211
      // Predicated region
      $region9: #{tpu_custom_call.1} parent=5 // pred_check
        _
      $region10: #{tpu_custom_call.1} parent=5 // pred_check_branch
        %214 = sbr.rel (%p211) target = $region12
      $region11: #{tpu_custom_call.1} parent=5 // pred_region
        %s215 = ssub.s32 %s14, 1
        // Predicated region
        $region13: #{tpu_custom_call.1} parent=11 // pred_check
          %p216 = pneg %p121
        $region14: #{tpu_custom_call.1} parent=11 // pred_check_branch
          %218 = sbr.rel (%p216) target = $region16
        $region15: #{tpu_custom_call.1} parent=11 // pred_region
          %s219 = sadd.s32 %s25, %s26
          %p220 = scmp.lt.s32.totalorder %s219, 0
          %s221 = scalar_select %p220, %s219, 0
          %s222 = smul.addr %s221, 4
          %s223 = scalar_lea.vmem %s2, %s222
          %s224 = sadd.s32 %s25, %s26
        $region16: #{tpu_custom_call.1} parent=11 // pred_fallthru
          _
      $region12: #{tpu_custom_call.1} parent=5 // pred_fallthru
        _
      %p225 = scmp.lt.s32.totalorder %s14, 2
      // Predicated region
      $region17: #{tpu_custom_call.1} parent=5 // pred_check
        %p226 = pneg %p225
      $region18: #{tpu_custom_call.1} parent=5 // pred_check_branch
        %228 = sbr.rel (%p226) target = $region20
      $region19: #{tpu_custom_call.1} parent=5 // pred_region
        // Predicated region
        $region21: #{tpu_custom_call.1} parent=19 // pred_check
          %p229 = pneg %p57
        $region22: #{tpu_custom_call.1} parent=19 // pred_check_branch
          %231 = sbr.rel (%p229) target = $region24
        $region23: #{tpu_custom_call.1} parent=19 // pred_region
          %s232 = sadd.s32 %s22, %s23
          %s233 = smul.u32 16, %s232
          %p234 = scmp.lt.s32.totalorder %s21, 1
          %s235 = scalar_select %p234, %s21, 1
          %p236 = scmp.lt.s32.totalorder %s233, 15
          %s237 = scalar_select %p236, %s233, 15
          %s238 = smul.addr %s235, 16
          %s239 = sadd.s32 %s237, %s238
          %s240 = smul.addr %s239, 8
          %s241 = scalar_lea.vmem %s0, %s240
          %s242 = sadd.s32 %s22, %s23
          %s243 = smul.u32 16, %s242
        $region24: #{tpu_custom_call.1} parent=19 // pred_fallthru
          _
        // Predicated region
        $region25: #{tpu_custom_call.1} parent=19 // pred_check
          %p244 = pneg %p87
        $region26: #{tpu_custom_call.1} parent=19 // pred_check_branch
          %246 = sbr.rel (%p244) target = $region28
        $region27: #{tpu_custom_call.1} parent=19 // pred_region
          %s247 = sadd.s32 %s22, %s23
          %p248 = scmp.lt.s32.totalorder %s21, 1
          %s249 = scalar_select %p248, %s21, 1
          %p250 = scmp.lt.s32.totalorder %s247, 0
          %s251 = scalar_select %p250, %s247, 0
          %s252 = sadd.s32 %s251, %s249
          %s253 = smul.addr %s252, 4
          %s254 = scalar_lea.vmem %s1, %s253
          %s255 = sadd.s32 %s22, %s23
        $region28: #{tpu_custom_call.1} parent=19 // pred_fallthru
          _
        // Predicated region
        $region29: #{tpu_custom_call.1} parent=19 // pred_check
          %p256 = pneg %p141
        $region30: #{tpu_custom_call.1} parent=19 // pred_check_branch
          %258 = sbr.rel (%p256) target = $region32
        $region31: #{tpu_custom_call.1} parent=19 // pred_region
          %p259 = scmp.lt.s32.totalorder %s21, 1
          %s260 = scalar_select %p259, %s21, 1
          %s261 = smul.addr %s260, 8
          %s262 = scalar_lea.vmem %s3, %s261
        $region32: #{tpu_custom_call.1} parent=19 // pred_fallthru
          _
        // Predicated region
        $region33: #{tpu_custom_call.1} parent=19 // pred_check
          %p263 = pneg %p167
        $region34: #{tpu_custom_call.1} parent=19 // pred_check_branch
          %265 = sbr.rel (%p263) target = $region36
        $region35: #{tpu_custom_call.1} parent=19 // pred_region
          %p266 = scmp.lt.s32.totalorder %s21, 1
          %s267 = scalar_select %p266, %s21, 1
          %s268 = smul.addr %s267, 8
          %s269 = scalar_lea.vmem %s4, %s268
        $region36: #{tpu_custom_call.1} parent=19 // pred_fallthru
          _
      $region20: #{tpu_custom_call.1} parent=5 // pred_fallthru
        _
      %p270 = scmp.le.s32.totalorder 1, %s14
      %p271 = scmp.lt.s32.totalorder %s14, 3
      %p272 = pnand %p270, %p271
      %p273 = pneg %p272
      // Predicated region
      $region37: #{tpu_custom_call.1} parent=5 // pred_check
        _
      $region38: #{tpu_custom_call.1} parent=5 // pred_check_branch
        %275 = sbr.rel (%p272) target = $region40
      $region39: #{tpu_custom_call.1} parent=5 // pred_region
        %s276 = ssub.s32 %s14, 1
        %s277 = sadd.s32 %s25, %s26
        %s278 = smul.u32 16, %s277
        %p279 = scmp.lt.s32.totalorder %s24, 1
        %s280 = scalar_select %p279, %s24, 1
        %p281 = scmp.lt.s32.totalorder %s278, 15
        %s282 = scalar_select %p281, %s278, 15
        %s283 = smul.addr %s280, 16
        %s284 = sadd.s32 %s282, %s283
        %s285 = smul.addr %s284, 8
        %s286 = scalar_lea.vmem %s0, %s285
        %p287 = pneg %p63
        %p288 = pneg %p60
        %s289 = sadd.s32 %s25, %s26
        %p290 = scmp.lt.s32.totalorder %s24, 1
        %s291 = scalar_select %p290, %s24, 1
        %p292 = scmp.lt.s32.totalorder %s289, 0
        %s293 = scalar_select %p292, %s289, 0
        %s294 = sadd.s32 %s293, %s291
        %s295 = smul.addr %s294, 4
        %s296 = scalar_lea.vmem %s1, %s295
        %p297 = pneg %p93
        %p298 = pneg %p90
        %s299 = sadd.s32 %s25, %s26
        %p300 = scmp.lt.s32.totalorder %s299, 0
        %s301 = scalar_select %p300, %s299, 0
        %s302 = smul.addr %s301, 4
        %s303 = scalar_lea.vmem %s2, %s302
        %p304 = pneg %p121
        %p305 = pneg %p118
        %p306 = scmp.lt.s32.totalorder %s24, 1
        %s307 = scalar_select %p306, %s24, 1
        %s308 = smul.addr %s307, 8
        %s309 = scalar_lea.vmem %s3, %s308
        %p310 = pneg %p147
        %p311 = pneg %p144
        %p312 = scmp.lt.s32.totalorder %s24, 1
        %s313 = scalar_select %p312, %s24, 1
        %s314 = smul.addr %s313, 8
        %s315 = scalar_lea.vmem %s4, %s314
        %p316 = pneg %p173
        %p317 = pneg %p170
        %p318 = pneg %p201
        %p319 = pneg %p198
        %s320 = sand.u32 %s188, 1
        %s321 = scalar_lea.sflag [#allocation7], %s320
        %s322 = sand.u32 %s188, 1
        %s323 = smul.addr %s322, 8
        %s324 = scalar_lea.vmem [#allocation6], %s323
        %s325 = sadd.s32 %s25, %s26
        %s326 = smul.u32 16, %s325
        %p327 = scmp.lt.s32.totalorder %s24, 1
        %s328 = scalar_select %p327, %s24, 1
        %p329 = scmp.lt.s32.totalorder %s326, 15
        %s330 = scalar_select %p329, %s326, 15
        %s331 = smul.addr %s328, 16
        %s332 = sadd.s32 %s330, %s331
        %s333 = smul.addr %s332, 8
        %s334 = scalar_lea.vmem %s0, %s333
        %s335 = sadd.s32 %s25, %s26
        %s336 = smul.u32 16, %s335
        %s337 = sadd.s32 %s25, %s26
        %p338 = scmp.lt.s32.totalorder %s24, 1
        %s339 = scalar_select %p338, %s24, 1
        %p340 = scmp.lt.s32.totalorder %s337, 0
        %s341 = scalar_select %p340, %s337, 0
        %s342 = sadd.s32 %s341, %s339
        %s343 = smul.addr %s342, 4
        %s344 = scalar_lea.vmem %s1, %s343
        %s345 = sadd.s32 %s25, %s26
        %s346 = sadd.s32 %s25, %s26
        %p347 = scmp.lt.s32.totalorder %s346, 0
        %s348 = scalar_select %p347, %s346, 0
        %s349 = smul.addr %s348, 4
        %s350 = scalar_lea.vmem %s2, %s349
        %s351 = sadd.s32 %s25, %s26
        %p352 = scmp.lt.s32.totalorder %s24, 1
        %s353 = scalar_select %p352, %s24, 1
        %s354 = smul.addr %s353, 8
        %s355 = scalar_lea.vmem %s3, %s354
        %p356 = scmp.lt.s32.totalorder %s24, 1
        %s357 = scalar_select %p356, %s24, 1
        %s358 = smul.addr %s357, 8
        %s359 = scalar_lea.vmem %s4, %s358
        %p360 = scmp.eq.s32.totalorder %s26, 0
        // Predicated region
        $region41: #{tpu_custom_call.1} parent=39 // pred_check
          %p361 = pneg %p360
        $region42: #{tpu_custom_call.1} parent=39 // pred_check_branch
          %363 = sbr.rel (%p361) target = $region44
        $region43: #{tpu_custom_call.1} parent=39 // pred_region
          %vm364 = vcmask 57344
          %365 = vst.msk [vmem:[#allocation2] sm:$0x1] %vm364, 0.0
          %366 = vst [vmem:[#allocation3] sm:$0x1] 0.0
          %367 = vst [vmem:[#allocation4] sm:$0x1] 0.0
          %368 = vst [vmem:[#allocation5] sm:$0x1] 0.0
        $region44: #{tpu_custom_call.1} parent=39 // pred_fallthru
          _
        %v369 = vld [vmem:[%s334] sm:$0xff]
        %v370 = vld [vmem:[%s334 + $0x8] sm:$0xff]
        %v371 = vld [vmem:[%s334 + $0x10] sm:$0xff]
        %v372 = vld [vmem:[%s334 + $0x18] sm:$0xff]
        %v373 = vld [vmem:[%s334 + $0x20] sm:$0xff]
        %v374 = vld [vmem:[%s334 + $0x28] sm:$0xff]
        %v375 = vld [vmem:[%s334 + $0x30] sm:$0xff]
        %v376 = vld [vmem:[%s334 + $0x38] sm:$0xff]
        %v377 = vld [vmem:[%s334 + $0x40] sm:$0xff]
        %v378 = vld [vmem:[%s334 + $0x48] sm:$0xff]
        %v379 = vld [vmem:[%s334 + $0x50] sm:$0xff]
        %v380 = vld [vmem:[%s334 + $0x58] sm:$0xff]
        %v381 = vld [vmem:[%s334 + $0x60] sm:$0xff]
        %v382 = vld [vmem:[%s334 + $0x68] sm:$0xff]
        %v383 = vld [vmem:[%s334 + $0x70] sm:$0xff]
        %v384 = vld [vmem:[%s334 + $0x78] sm:$0xff]
        %v385 = vmax.f32 %v369, 0.0001
        %v386 = vmax.f32 %v370, 0.0001
        %v387 = vmax.f32 %v371, 0.0001
        %v388 = vmax.f32 %v372, 0.0001
        %v389 = vmax.f32 %v373, 0.0001
        %v390 = vmax.f32 %v374, 0.0001
        %v391 = vmax.f32 %v375, 0.0001
        %v392 = vmax.f32 %v376, 0.0001
        %v393 = vmax.f32 %v377, 0.0001
        %v394 = vmax.f32 %v378, 0.0001
        %v395 = vmax.f32 %v379, 0.0001
        %v396 = vmax.f32 %v380, 0.0001
        %v397 = vmax.f32 %v381, 0.0001
        %v398 = vmax.f32 %v382, 0.0001
        %v399 = vmax.f32 %v383, 0.0001
        %v400 = vmax.f32 %v384, 0.0001
        %v401 = vmin.f32 %v385, 0.9999
        %v402 = vmin.f32 %v386, 0.9999
        %v403 = vmin.f32 %v387, 0.9999
        %v404 = vmin.f32 %v388, 0.9999
        %v405 = vmin.f32 %v389, 0.9999
        %v406 = vmin.f32 %v390, 0.9999
        %v407 = vmin.f32 %v391, 0.9999
        %v408 = vmin.f32 %v392, 0.9999
        %v409 = vmin.f32 %v393, 0.9999
        %v410 = vmin.f32 %v394, 0.9999
        %v411 = vmin.f32 %v395, 0.9999
        %v412 = vmin.f32 %v396, 0.9999
        %v413 = vmin.f32 %v397, 0.9999
        %v414 = vmin.f32 %v398, 0.9999
        %v415 = vmin.f32 %v399, 0.9999
        %v416 = vmin.f32 %v400, 0.9999
        %v417 = vld [vmem:[%s344] sm:$0xf]
        %v418 = vld [vmem:[%s350] sm:$0xf]
        %v419 = vld [vmem:[%s355] sm:$0xff]
        %v420 = vld [vmem:[%s359] sm:$0x1f]
        %vm421 = vcmp.ne.f32.partialorder %v419, -1.0
        %423 = vrot.lane.b32.xlu0 %v419, 2
        %v424 = vpop.permute.xlu0 %423
        %v426 = vsub.f32 %v419, %v424
        %428 = vrot.lane.b32.xlu0 %v426, 127
        %v429 = vpop.permute.xlu0 %428
        %v431 = vmul.f32 %v426, %v429
        %v433 = vrot.slane %v418, 6
        %v435 = vsub.f32 %v418, %v433
        %v437 = vrot.slane %v435, 1
        %v439 = vmul.f32 %v435, %v437
        %v440 = vlaneseq
        %v441 = vshrl.u32 %v440, 7
        %v442 = vsub.s32 2, %v441
        %v443 = vrot.slane %v418, %v442
        %444 = vset.pattern.permute.xlu0 2
        %445 = vperm.xlu0 %444, %v419
        %v446 = vpop.permute.xlu0 %445
        %v448 = vmin.f32 %v443, %v446
        %v449 = vlaneseq
        %v450 = vshrl.u32 %v449, 7
        %v451 = vsub.s32 0, %v450
        %v452 = vrot.slane %v418, %v451
        %453 = vset.pattern.permute.xlu0 0
        %454 = vperm.xlu0 %453, %v419
        %v455 = vpop.permute.xlu0 %454
        %v457 = vmax.f32 %v452, %v455
        %v458 = vsub.f32 %v448, %v457
        %v459 = vmax.f32 %v458, 0.0
        %v460 = vlaneseq
        %v461 = vshrl.u32 %v460, 7
        %v462 = vsub.s32 3, %v461
        %v463 = vrot.slane %v418, %v462
        %464 = vset.pattern.permute.xlu0 3
        %465 = vperm.xlu0 %464, %v419
        %v466 = vpop.permute.xlu0 %465
        %v468 = vmin.f32 %v463, %v466
        %v469 = vlaneseq
        %v470 = vshrl.u32 %v469, 7
        %v471 = vsub.s32 1, %v470
        %v472 = vrot.slane %v418, %v471
        %473 = vset.pattern.permute.xlu0 1
        %474 = vperm.xlu0 %473, %v419
        %v475 = vpop.permute.xlu0 %474
        %v477 = vmax.f32 %v472, %v475
        %v478 = vsub.f32 %v468, %v477
        %v479 = vmax.f32 %v478, 0.0
        %v480 = vmul.f32 %v459, %v479
        %v481 = vlaneseq
        %v482 = vshrl.u32 %v481, 7
        %v483 = vsub.s32 2, %v482
        %v484 = vrot.slane %v439, %v483
        %486 = vset.pattern.permute.xlu0 2
        %487 = vperm.xlu0 %486, %v431
        %v488 = vpop.permute.xlu0 %487
        %v490 = vadd.f32 %v484, %v488
        %v491 = vsub.f32 %v490, %v480
        %v492 = vmax.f32 %v491, 1e-08
        %v493 = vrcp.pop %v492
        %v494 = vmul.f32 %v492, %v493
        %v495 = vsub.f32 2.0, %v494
        %v496 = vmul.f32 %v493, %v495
        %v497 = vmul.f32 %v480, %v496
        %v498 = vsel %vm421, 1, 0
        %499 = vset.pattern.permute.xlu0 4
        %500 = vperm.xlu0 %499, %v498
        %v501 = vpop.permute.xlu0 %500
        %vm502 = vcmp.eq.s32.totalorder %v501, 1
        %v503 = vsel %vm502, %v497, -1.0
        %v504 = vrot.slane %v503, 4
        %v505 = vmax.f32 %v503, %v504
        %v506 = vrot.slane %v505, 2
        %v507 = vmax.f32 %v505, %v506
        %v508 = vrot.slane %v507, 1
        %v509 = vmax.f32 %v507, %v508
        %v510 = vlaneseq
        %v511 = vshrl.u32 %v510, 7
        %vm512 = vcmp.eq.f32.partialorder %v503, %v509
        %v513 = vsel %vm512, %v511, 8
        %v514 = vrot.slane %v513, 4
        %vm515 = vcmp.lt.s32.totalorder %v513, %v514
        %v516 = vsel %vm515, %v513, %v514
        %v517 = vrot.slane %v516, 2
        %vm518 = vcmp.lt.s32.totalorder %v516, %v517
        %v519 = vsel %vm518, %v516, %v517
        %v520 = vrot.slane %v519, 1
        %vm521 = vcmp.lt.s32.totalorder %v519, %v520
        %v522 = vsel %vm521, %v519, %v520
        %vm523 = vcmp.eq.s32.totalorder %v511, %v522
        %v524 = vsel %vm523, 1, 0
        %v525 = vcvt.s32.f32 %v524
        %vm526 = vcmp.ge.f32.partialorder %v509, 0.5
        %v527 = vsel %vm526, 1, 0
        %v528 = vcvt.s32.f32 %v527
        %vm529 = vcmp.lt.f32.partialorder %v509, 0.4
        %vm530 = vmor %vm529, %vm526
        %v531 = vsel %vm530, 1, 0
        %v532 = vcvt.s32.f32 %v531
        %v533 = vmul.f32 %v401, %v401
        %v534 = vmul.f32 %v402, %v402
        %v535 = vmul.f32 %v403, %v403
        %v536 = vmul.f32 %v404, %v404
        %v537 = vmul.f32 %v405, %v405
        %v538 = vmul.f32 %v406, %v406
        %v539 = vmul.f32 %v407, %v407
        %v540 = vmul.f32 %v408, %v408
        %v541 = vmul.f32 %v409, %v409
        %v542 = vmul.f32 %v410, %v410
        %v543 = vmul.f32 %v411, %v411
        %v544 = vmul.f32 %v412, %v412
        %v545 = vmul.f32 %v413, %v413
        %v546 = vmul.f32 %v414, %v414
        %v547 = vmul.f32 %v415, %v415
        %v548 = vmul.f32 %v416, %v416
        %v549 = vmul.f32 %v533, 0.75
        %v550 = vmul.f32 %v534, 0.75
        %v551 = vmul.f32 %v535, 0.75
        %v552 = vmul.f32 %v536, 0.75
        %v553 = vmul.f32 %v537, 0.75
        %v554 = vmul.f32 %v538, 0.75
        %v555 = vmul.f32 %v539, 0.75
        %v556 = vmul.f32 %v540, 0.75
        %v557 = vmul.f32 %v541, 0.75
        %v558 = vmul.f32 %v542, 0.75
        %v559 = vmul.f32 %v543, 0.75
        %v560 = vmul.f32 %v544, 0.75
        %v561 = vmul.f32 %v545, 0.75
        %v562 = vmul.f32 %v546, 0.75
        %v563 = vmul.f32 %v547, 0.75
        %v564 = vmul.f32 %v548, 0.75
        %v565 = vsub.f32 1.0, %v401
        %v566 = vsub.f32 1.0, %v402
        %v567 = vsub.f32 1.0, %v403
        %v568 = vsub.f32 1.0, %v404
        %v569 = vsub.f32 1.0, %v405
        %v570 = vsub.f32 1.0, %v406
        %v571 = vsub.f32 1.0, %v407
        %v572 = vsub.f32 1.0, %v408
        %v573 = vsub.f32 1.0, %v409
        %v574 = vsub.f32 1.0, %v410
        %v575 = vsub.f32 1.0, %v411
        %v576 = vsub.f32 1.0, %v412
        %v577 = vsub.f32 1.0, %v413
        %v578 = vsub.f32 1.0, %v414
        %v579 = vsub.f32 1.0, %v415
        %v580 = vsub.f32 1.0, %v416
        %v581 = vlog2.pop %v565
        %v582 = vmul.f32 %v581, 0.6931472
        %v583 = vlog2.pop %v566
        %v584 = vmul.f32 %v583, 0.6931472
        %v585 = vlog2.pop %v567
        %v586 = vmul.f32 %v585, 0.6931472
        %v587 = vlog2.pop %v568
        %v588 = vmul.f32 %v587, 0.6931472
        %v589 = vlog2.pop %v569
        %v590 = vmul.f32 %v589, 0.6931472
        %v591 = vlog2.pop %v570
        %v592 = vmul.f32 %v591, 0.6931472
        %v593 = vlog2.pop %v571
        %v594 = vmul.f32 %v593, 0.6931472
        %v595 = vlog2.pop %v572
        %v596 = vmul.f32 %v595, 0.6931472
        %v597 = vlog2.pop %v573
        %v598 = vmul.f32 %v597, 0.6931472
        %v599 = vlog2.pop %v574
        %v600 = vmul.f32 %v599, 0.6931472
        %v601 = vlog2.pop %v575
        %v602 = vmul.f32 %v601, 0.6931472
        %v603 = vlog2.pop %v576
        %v604 = vmul.f32 %v603, 0.6931472
        %v605 = vlog2.pop %v577
        %v606 = vmul.f32 %v605, 0.6931472
        %v607 = vlog2.pop %v578
        %v608 = vmul.f32 %v607, 0.6931472
        %v609 = vlog2.pop %v579
        %v610 = vmul.f32 %v609, 0.6931472
        %v611 = vlog2.pop %v580
        %v612 = vmul.f32 %v611, 0.6931472
        %v613 = vsub.f32 0.0, %v582
        %v614 = vsub.f32 0.0, %v584
        %v615 = vsub.f32 0.0, %v586
        %v616 = vsub.f32 0.0, %v588
        %v617 = vsub.f32 0.0, %v590
        %v618 = vsub.f32 0.0, %v592
        %v619 = vsub.f32 0.0, %v594
        %v620 = vsub.f32 0.0, %v596
        %v621 = vsub.f32 0.0, %v598
        %v622 = vsub.f32 0.0, %v600
        %v623 = vsub.f32 0.0, %v602
        %v624 = vsub.f32 0.0, %v604
        %v625 = vsub.f32 0.0, %v606
        %v626 = vsub.f32 0.0, %v608
        %v627 = vsub.f32 0.0, %v610
        %v628 = vsub.f32 0.0, %v612
        %v629 = vmul.f32 %v549, %v613
        %v630 = vmul.f32 %v550, %v614
        %v631 = vmul.f32 %v551, %v615
        %v632 = vmul.f32 %v552, %v616
        %v633 = vmul.f32 %v553, %v617
        %v634 = vmul.f32 %v554, %v618
        %v635 = vmul.f32 %v555, %v619
        %v636 = vmul.f32 %v556, %v620
        %v637 = vmul.f32 %v557, %v621
        %v638 = vmul.f32 %v558, %v622
        %v639 = vmul.f32 %v559, %v623
        %v640 = vmul.f32 %v560, %v624
        %v641 = vmul.f32 %v561, %v625
        %v642 = vmul.f32 %v562, %v626
        %v643 = vmul.f32 %v563, %v627
        %v644 = vmul.f32 %v564, %v628
        %v645 = vld [vmem:[#allocation2] sm:$0x1]
        %646 = vmatprep.subr.mxu0 0.0
        %647 = vmatpush1.msra.mxu0 %v629
        %648 = vmatprep.subr.mxu0 0.0
        %649 = vmatpush1.msra.mxu0 %v630
        %650 = vmatprep.subr.mxu0 0.0
        %651 = vmatpush1.msra.mxu0 %v631
        %652 = vmatprep.subr.mxu0 0.0
        %653 = vmatpush1.msra.mxu0 %v632
        %654 = vmatprep.subr.mxu0 0.0
        %655 = vmatpush1.msra.mxu0 %v633
        %656 = vmatprep.subr.mxu0 0.0
        %657 = vmatpush1.msra.mxu0 %v634
        %658 = vmatprep.subr.mxu0 0.0
        %659 = vmatpush1.msra.mxu0 %v635
        %660 = vmatprep.subr.mxu0 0.0
        %661 = vmatpush1.msra.mxu0 %v636
        %662 = vmatprep.subr.mxu0 0.0
        %663 = vmatpush1.msra.mxu0 %v637
        %664 = vmatprep.subr.mxu0 0.0
        %665 = vmatpush1.msra.mxu0 %v638
        %666 = vmatprep.subr.mxu0 0.0
        %667 = vmatpush1.msra.mxu0 %v639
        %668 = vmatprep.subr.mxu0 0.0
        %669 = vmatpush1.msra.mxu0 %v640
        %670 = vmatprep.subr.mxu0 0.0
        %671 = vmatpush1.msra.mxu0 %v641
        %672 = vmatprep.subr.mxu0 0.0
        %673 = vmatpush1.msra.mxu0 %v642
        %674 = vmatprep.subr.mxu0 0.0
        %675 = vmatpush1.msra.mxu0 %v643
        %676 = vmatprep.subr.mxu0 0.0
        %677 = vmatpush1.msra.mxu0 %v644
        %678 = vmatprep.subr.mxu0 0.0
        %679 = vmatpush1.msra.mxu0 0.0
        %680 = vmatprep.subr.mxu0 0.0
        %681 = vmatpush1.msra.mxu0 0.0
        %682 = vmatprep.subr.mxu0 0.0
        %683 = vmatpush1.msra.mxu0 0.0
        %684 = vmatprep.subr.mxu0 0.0
        %685 = vmatpush1.msra.mxu0 0.0
        %686 = vmatprep.subr.mxu0 0.0
        %687 = vmatpush1.msra.mxu0 0.0
        %688 = vmatprep.subr.mxu0 0.0
        %689 = vmatpush1.msra.mxu0 0.0
        %690 = vmatprep.subr.mxu0 0.0
        %691 = vmatpush1.msra.mxu0 0.0
        %692 = vmatprep.subr.mxu0 0.0
        %693 = vmatpush1.msra.mxu0 0.0
        %694 = vmatprep.subr.mxu0 0.0
        %695 = vmatpush1.msra.mxu0 0.0
        %696 = vmatprep.subr.mxu0 0.0
        %697 = vmatpush1.msra.mxu0 0.0
        %698 = vmatprep.subr.mxu0 0.0
        %699 = vmatpush1.msra.mxu0 0.0
        %700 = vmatprep.subr.mxu0 0.0
        %701 = vmatpush1.msra.mxu0 0.0
        %702 = vmatprep.subr.mxu0 0.0
        %703 = vmatpush1.msra.mxu0 0.0
        %704 = vmatprep.subr.mxu0 0.0
        %705 = vmatpush1.msra.mxu0 0.0
        %706 = vmatprep.subr.mxu0 0.0
        %707 = vmatpush1.msra.mxu0 0.0
        %708 = vmatprep.subr.mxu0 0.0
        %709 = vmatpush1.msra.mxu0 0.0
        %710 = vmatprep.mubr.f32.mxu0 0.0
        %711 = vmatmul.mubr.f32.gmra.mrb[0].mxu0 %v532
        %v712 = vpop.f32.mrb[0].mxu0
        %v713 = vadd.f32 0.0, %v712
        %v714 = vpop.f32.mrb[0].mxu0
        %715 = vdwg.mxu0
        %v716 = vadd.f32 %v645, %v713
        %vm717 = vcmask 57344
        %718 = vst.msk [vmem:[#allocation2] sm:$0x1] %vm717, %v716
        %v719 = vlaneseq
        %v720 = vand.u32 %v719, 127
        %v721 = vcvt.f32.s32.to.zero.pseudo %v419
        %722 = vset.pattern.permute.xlu0 4
        %723 = vperm.xlu0 %722, %v721
        %v724 = vpop.permute.xlu0 %723
        %vm725 = vcmp.eq.s32.totalorder %v720, %v724
        %v726 = vsel %vm725, 1, 0
        %v727 = vcvt.s32.f32 %v726
        %vm728 = vcmask 64512
        %v730 = vsel %vm728, %v727, 0
        %v733 = vsel %vm728, %v401, 0
        %v736 = vsel %vm728, %v402, 0
        %v739 = vsel %vm728, %v403, 0
        %v742 = vsel %vm728, %v404, 0
        %v745 = vsel %vm728, %v405, 0
        %v748 = vsel %vm728, %v406, 0
        %v751 = vsel %vm728, %v407, 0
        %v754 = vsel %vm728, %v408, 0
        %v757 = vsel %vm728, %v409, 0
        %v760 = vsel %vm728, %v410, 0
        %v763 = vsel %vm728, %v411, 0
        %v766 = vsel %vm728, %v412, 0
        %v769 = vsel %vm728, %v413, 0
        %v772 = vsel %vm728, %v414, 0
        %v775 = vsel %vm728, %v415, 0
        %v778 = vsel %vm728, %v416, 0
        %780 = vmatprep.subr.mxu0 0.0
        %781 = vmatpush1.xpose.msra.mxu0 %v733
        %782 = vmatprep.subr.mxu0 0.0
        %783 = vmatpush1.xpose.msra.mxu0 %v736
        %784 = vmatprep.subr.mxu0 0.0
        %785 = vmatpush1.xpose.msra.mxu0 %v739
        %786 = vmatprep.subr.mxu0 0.0
        %787 = vmatpush1.xpose.msra.mxu0 %v742
        %788 = vmatprep.subr.mxu0 0.0
        %789 = vmatpush1.xpose.msra.mxu0 %v745
        %790 = vmatprep.subr.mxu0 0.0
        %791 = vmatpush1.xpose.msra.mxu0 %v748
        %792 = vmatprep.subr.mxu0 0.0
        %793 = vmatpush1.xpose.msra.mxu0 %v751
        %794 = vmatprep.subr.mxu0 0.0
        %795 = vmatpush1.xpose.msra.mxu0 %v754
        %796 = vmatprep.subr.mxu0 0.0
        %797 = vmatpush1.xpose.msra.mxu0 %v757
        %798 = vmatprep.subr.mxu0 0.0
        %799 = vmatpush1.xpose.msra.mxu0 %v760
        %800 = vmatprep.subr.mxu0 0.0
        %801 = vmatpush1.xpose.msra.mxu0 %v763
        %802 = vmatprep.subr.mxu0 0.0
        %803 = vmatpush1.xpose.msra.mxu0 %v766
        %804 = vmatprep.subr.mxu0 0.0
        %805 = vmatpush1.xpose.msra.mxu0 %v769
        %806 = vmatprep.subr.mxu0 0.0
        %807 = vmatpush1.xpose.msra.mxu0 %v772
        %808 = vmatprep.subr.mxu0 0.0
        %809 = vmatpush1.xpose.msra.mxu0 %v775
        %810 = vmatprep.subr.mxu0 0.0
        %811 = vmatpush1.xpose.msra.mxu0 %v778
        %812 = vmatprep.subr.mxu0 0.0
        %813 = vmatpush1.xpose.msra.mxu0 0.0
        %814 = vmatprep.subr.mxu0 0.0
        %815 = vmatpush1.xpose.msra.mxu0 0.0
        %816 = vmatprep.subr.mxu0 0.0
        %817 = vmatpush1.xpose.msra.mxu0 0.0
        %818 = vmatprep.subr.mxu0 0.0
        %819 = vmatpush1.xpose.msra.mxu0 0.0
        %820 = vmatprep.subr.mxu0 0.0
        %821 = vmatpush1.xpose.msra.mxu0 0.0
        %822 = vmatprep.subr.mxu0 0.0
        %823 = vmatpush1.xpose.msra.mxu0 0.0
        %824 = vmatprep.subr.mxu0 0.0
        %825 = vmatpush1.xpose.msra.mxu0 0.0
        %826 = vmatprep.subr.mxu0 0.0
        %827 = vmatpush1.xpose.msra.mxu0 0.0
        %828 = vmatprep.subr.mxu0 0.0
        %829 = vmatpush1.xpose.msra.mxu0 0.0
        %830 = vmatprep.subr.mxu0 0.0
        %831 = vmatpush1.xpose.msra.mxu0 0.0
        %832 = vmatprep.subr.mxu0 0.0
        %833 = vmatpush1.xpose.msra.mxu0 0.0
        %834 = vmatprep.subr.mxu0 0.0
        %835 = vmatpush1.xpose.msra.mxu0 0.0
        %836 = vmatprep.subr.mxu0 0.0
        %837 = vmatpush1.xpose.msra.mxu0 0.0
        %838 = vmatprep.subr.mxu0 0.0
        %839 = vmatpush1.xpose.msra.mxu0 0.0
        %840 = vmatprep.subr.mxu0 0.0
        %841 = vmatpush1.xpose.msra.mxu0 0.0
        %842 = vmatprep.subr.mxu0 0.0
        %843 = vmatpush1.xpose.msra.mxu0 0.0
        %844 = vmatprep.mubr.f32.mxu0 0.0
        %845 = vmatmul.mubr.f32.gmra.mrb[0].mxu0 %v730
        %v846 = vpop.f32.mrb[0].mxu0
        %v847 = vadd.f32 0.0, %v846
        %v848 = vpop.f32.mrb[0].mxu0
        %849 = vdwg.mxu0
        %v850 = vmul.f32 %v525, %v847
        %v851 = vrot.slane %v850, 4
        %v852 = vadd.f32 %v850, %v851
        %v853 = vrot.slane %v852, 2
        %v854 = vadd.f32 %v852, %v853
        %v855 = vrot.slane %v854, 1
        %v856 = vadd.f32 %v854, %v855
        %v857 = vsub.f32 1.0, %v856
        %v858 = vmul.f32 %v857, %v857
        %v859 = vmul.f32 %v856, %v856
        %v860 = vmul.f32 %v858, 0.25
        %v861 = vlog2.pop %v856
        %v862 = vmul.f32 %v861, 0.6931472
        %v863 = vsub.f32 0.0, %v862
        %v864 = vmul.f32 %v860, %v863
        %v865 = vmul.f32 %v859, 0.75
        %v866 = vlog2.pop %v857
        %v867 = vmul.f32 %v866, 0.6931472
        %v868 = vsub.f32 0.0, %v867
        %v869 = vmul.f32 %v865, %v868
        %v870 = vld [vmem:[#allocation3] sm:$0x1]
        %v871 = vsub.f32 %v864, %v869
        %v872 = vsel %vm526, %v871, 0.0
        %v873 = vadd.f32 %v870, %v872
        %874 = vst [vmem:[#allocation3] sm:$0x1] %v873
        %v875 = vld [vmem:[#allocation5] sm:$0x1]
        %v876 = vadd.f32 %v875, %v528
        %877 = vst [vmem:[#allocation5] sm:$0x1] %v876
        %v879 = vsel %vm728, %v420, 0
        %881 = vmatprep.subr.mxu0 0.0
        %882 = vmatpush1.msra.mxu0 %v525
        %883 = vmatprep.subr.mxu0 0.0
        %884 = vmatpush1.msra.mxu0 0.0
        %885 = vmatprep.subr.mxu0 0.0
        %886 = vmatpush1.msra.mxu0 0.0
        %887 = vmatprep.subr.mxu0 0.0
        %888 = vmatpush1.msra.mxu0 0.0
        %889 = vmatprep.subr.mxu0 0.0
        %890 = vmatpush1.msra.mxu0 0.0
        %891 = vmatprep.subr.mxu0 0.0
        %892 = vmatpush1.msra.mxu0 0.0
        %893 = vmatprep.subr.mxu0 0.0
        %894 = vmatpush1.msra.mxu0 0.0
        %895 = vmatprep.subr.mxu0 0.0
        %896 = vmatpush1.msra.mxu0 0.0
        %897 = vmatprep.subr.mxu0 0.0
        %898 = vmatpush1.msra.mxu0 0.0
        %899 = vmatprep.subr.mxu0 0.0
        %900 = vmatpush1.msra.mxu0 0.0
        %901 = vmatprep.subr.mxu0 0.0
        %902 = vmatpush1.msra.mxu0 0.0
        %903 = vmatprep.subr.mxu0 0.0
        %904 = vmatpush1.msra.mxu0 0.0
        %905 = vmatprep.subr.mxu0 0.0
        %906 = vmatpush1.msra.mxu0 0.0
        %907 = vmatprep.subr.mxu0 0.0
        %908 = vmatpush1.msra.mxu0 0.0
        %909 = vmatprep.subr.mxu0 0.0
        %910 = vmatpush1.msra.mxu0 0.0
        %911 = vmatprep.subr.mxu0 0.0
        %912 = vmatpush1.msra.mxu0 0.0
        %913 = vmatprep.subr.mxu0 0.0
        %914 = vmatpush1.msra.mxu0 0.0
        %915 = vmatprep.subr.mxu0 0.0
        %916 = vmatpush1.msra.mxu0 0.0
        %917 = vmatprep.subr.mxu0 0.0
        %918 = vmatpush1.msra.mxu0 0.0
        %919 = vmatprep.subr.mxu0 0.0
        %920 = vmatpush1.msra.mxu0 0.0
        %921 = vmatprep.subr.mxu0 0.0
        %922 = vmatpush1.msra.mxu0 0.0
        %923 = vmatprep.subr.mxu0 0.0
        %924 = vmatpush1.msra.mxu0 0.0
        %925 = vmatprep.subr.mxu0 0.0
        %926 = vmatpush1.msra.mxu0 0.0
        %927 = vmatprep.subr.mxu0 0.0
        %928 = vmatpush1.msra.mxu0 0.0
        %929 = vmatprep.subr.mxu0 0.0
        %930 = vmatpush1.msra.mxu0 0.0
        %931 = vmatprep.subr.mxu0 0.0
        %932 = vmatpush1.msra.mxu0 0.0
        %933 = vmatprep.subr.mxu0 0.0
        %934 = vmatpush1.msra.mxu0 0.0
        %935 = vmatprep.subr.mxu0 0.0
        %936 = vmatpush1.msra.mxu0 0.0
        %937 = vmatprep.subr.mxu0 0.0
        %938 = vmatpush1.msra.mxu0 0.0
        %939 = vmatprep.subr.mxu0 0.0
        %940 = vmatpush1.msra.mxu0 0.0
        %941 = vmatprep.subr.mxu0 0.0
        %942 = vmatpush1.msra.mxu0 0.0
        %943 = vmatprep.subr.mxu0 0.0
        %944 = vmatpush1.msra.mxu0 0.0
        %945 = vmatprep.mubr.f32.mxu0 0.0
        %946 = vmatmul.mubr.f32.gmra.mrb[0].mxu0 %v879
        %v947 = vpop.f32.mrb[0].mxu0
        %v948 = vadd.f32 0.0, %v947
        %v949 = vpop.f32.mrb[0].mxu0
        %950 = vdwg.mxu0
        %v951 = vmul.f32 %v435, 0.5
        %v953 = vrot.slane %v951, 2
        %v955 = vadd.f32 %v418, %v953
        %v957 = vrot.slane %v948, 6
        %v959 = vsub.f32 %v948, %v957
        %v960 = vmul.f32 %v959, 0.5
        %v962 = vrot.slane %v960, 2
        %v964 = vadd.f32 %v948, %v962
        %v965 = vmax.f32 %v959, 1.0
        %v966 = vrcp.pop %v435
        %v967 = vmul.f32 1.0, %v966
        %v968 = vsub.f32 %v964, %v955
        %v970 = vrot.slane %v967, 2
        %v972 = vmul.f32 %v968, %v970
        %v973 = vmul.f32 %v972, 10.0
        %v974 = vmul.f32 %v965, %v967
        %v975 = vlog2.pop %v974
        %v976 = vmul.f32 %v975, 0.6931472
        %v977 = vmul.f32 %v976, 5.0
        %v978 = vsub.f32 %v973, %v417
        %v979 = vand.u32 2147483647, %v978
        %vm980 = vcmp.le.f32.partialorder %v979, 0.11111111
        %v981 = vmul.f32 %v979, 4.5
        %v982 = vmul.f32 %v981, %v979
        %v983 = vsub.f32 %v979, 0.055555556
        %v984 = vsel %vm980, %v982, %v983
        %v986 = vrot.slane %v984, 1
        %v988 = vadd.f32 %v984, %v986
        %v989 = vsub.f32 %v977, %v417
        %v990 = vand.u32 2147483647, %v989
        %vm991 = vcmp.le.f32.partialorder %v990, 0.11111111
        %v992 = vmul.f32 %v990, 4.5
        %v993 = vmul.f32 %v992, %v990
        %v994 = vsub.f32 %v990, 0.055555556
        %v995 = vsel %vm991, %v993, %v994
        %v997 = vrot.slane %v995, 2
        %v999 = vadd.f32 %v988, %v997
        %v1000 = vrot.slane %v995, 3
        %v1002 = vadd.f32 %v999, %v1000
        %v1003 = vld [vmem:[#allocation4] sm:$0x1]
        %v1004 = vsel %vm526, %v1002, 0.0
        %v1005 = vadd.f32 %v1003, %v1004
        %1006 = vst [vmem:[#allocation4] sm:$0x1] %v1005
        // Predicated region
        $region45: #{tpu_custom_call.1} parent=39 // pred_check
          %p1007 = pneg %p360
        $region46: #{tpu_custom_call.1} parent=39 // pred_check_branch
          %1009 = sbr.rel (%p1007) target = $region48
        $region47: #{tpu_custom_call.1} parent=39 // pred_region
          %v1010 = vld [vmem:[#allocation2] sm:$0x1]
          %v1011 = vsel %vm717, %v1010, 0.0
          %1012 = vadd.xlane.f32.xlu0 %v1011
          %v1013 = vpop.xlane.xlu0 %1012
          %v1014 = vrot.slane %v1013, 4
          %v1015 = vadd.f32 %v1013, %v1014
          %v1016 = vrot.slane %v1015, 2
          %v1017 = vadd.f32 %v1015, %v1016
          %v1018 = vrot.slane %v1017, 1
          %v1019 = vadd.f32 %v1017, %v1018
          %s1020 = vtos %v1019
          %v1021 = vld [vmem:[#allocation3] sm:$0x1]
          %vm1022 = vcmask 1040384
          %v1023 = vsel %vm1022, %v1021, 0.0
          %1024 = vadd.xlane.f32.xlu0 %v1023
          %v1025 = vpop.xlane.xlu0 %1024
          %v1026 = vrot.slane %v1025, 4
          %v1027 = vadd.f32 %v1025, %v1026
          %v1028 = vrot.slane %v1027, 2
          %v1029 = vadd.f32 %v1027, %v1028
          %v1030 = vrot.slane %v1029, 1
          %v1031 = vadd.f32 %v1029, %v1030
          %s1032 = vtos %v1031
          %s1033 = sadd.f32 %s1020, %s1032
          %v1034 = vld [vmem:[#allocation4] sm:$0x1]
          %v1035 = vsel %vm1022, %v1034, 0.0
          %1036 = vadd.xlane.f32.xlu0 %v1035
          %v1037 = vpop.xlane.xlu0 %1036
          %v1038 = vrot.slane %v1037, 4
          %v1039 = vadd.f32 %v1037, %v1038
          %v1040 = vrot.slane %v1039, 2
          %v1041 = vadd.f32 %v1039, %v1040
          %v1042 = vrot.slane %v1041, 1
          %v1043 = vadd.f32 %v1041, %v1042
          %s1044 = vtos %v1043
          %v1045 = vld [vmem:[#allocation5] sm:$0x1]
          %v1046 = vsel %vm1022, %v1045, 0.0
          %1047 = vadd.xlane.f32.xlu0 %v1046
          %v1048 = vpop.xlane.xlu0 %1047
          %v1049 = vrot.slane %v1048, 4
          %v1050 = vadd.f32 %v1048, %v1049
          %v1051 = vrot.slane %v1050, 2
          %v1052 = vadd.f32 %v1050, %v1051
          %v1053 = vrot.slane %v1052, 1
          %v1054 = vadd.f32 %v1052, %v1053
          %s1055 = vtos %v1054
          %vm1056 = vcmp.eq.s32.totalorder %v511, 0
          %vm1057 = vcmp.eq.s32.totalorder %v511, 1
          %vm1058 = vcmp.eq.s32.totalorder %v511, 2
          %v1059 = vstv %s1055
          %v1060 = vsel %vm1058, %v1059, 0.0
          %v1061 = vstv %s1044
          %v1062 = vsel %vm1057, %v1061, %v1060
          %v1063 = vstv %s1033
          %v1064 = vsel %vm1056, %v1063, %v1062
          %1065 = vst [vmem:[%s324] sm:$0xff] %v1064
        $region48: #{tpu_custom_call.1} parent=39 // pred_fallthru
          _
        %s1066 = sand.u32 %s188, 1
        %s1067 = scalar_lea.sflag [#allocation7], %s1066
        %s1068 = sand.u32 %s188, 1
        %s1069 = smul.addr %s1068, 8
        %s1070 = scalar_lea.vmem [#allocation6], %s1069
        // Predicated region
        $region49: #{tpu_custom_call.1} parent=39 // pred_check
          %p1071 = pneg %p198
        $region50: #{tpu_custom_call.1} parent=39 // pred_check_branch
          %1073 = sbr.rel (%p1071) target = $region52
        $region51: #{tpu_custom_call.1} parent=39 // pred_region
          %s1075 = ssub.s32 128, 128
          %1076 = vsyncadd %s1067, %s1075
          %s1077 = sadd.s32 %s25, %s24
          %s1078 = smul.addr %s1077, 128
          %s1079 = scalar_lea.hbm %s5, %s1078
          %s1081 = sshll.u32 %s1070, 4
          %s1082 = int_to_ptr.vmem [resolvable:$true] %s1081
          %1084 = dma.vmem_to_hbm [thread:$0]  %s1082, 128, %s1079, %s1067
        $region52: #{tpu_custom_call.1} parent=39 // pred_fallthru
          _
      $region40: #{tpu_custom_call.1} parent=5 // pred_fallthru
        _
      %p1085 = scmp.le.s32.totalorder 2, %s14
      // Predicated region
      $region53: #{tpu_custom_call.1} parent=5 // pred_check
        %p1086 = pneg %p1085
      $region54: #{tpu_custom_call.1} parent=5 // pred_check_branch
        %1088 = sbr.rel (%p1086) target = $region56
      $region55: #{tpu_custom_call.1} parent=5 // pred_region
        %s1089 = ssub.s32 %s14, 2
        // Predicated region
        $region57: #{tpu_custom_call.1} parent=55 // pred_check
          %p1090 = pneg %p204
        $region58: #{tpu_custom_call.1} parent=55 // pred_check_branch
          %1092 = sbr.rel (%p1090) target = $region60
        $region59: #{tpu_custom_call.1} parent=55 // pred_region
          %s1093 = sand.u32 %s189, 1
          %s1094 = scalar_lea.sflag [#allocation7], %s1093
          %s1095 = sand.u32 %s189, 1
          %s1096 = smul.addr %s1095, 8
          %s1097 = scalar_lea.vmem [#allocation6], %s1096
          %1098 = dma.done %s1094, 128
        $region60: #{tpu_custom_call.1} parent=55 // pred_fallthru
          _
      $region56: #{tpu_custom_call.1} parent=5 // pred_fallthru
        _
    $region6: #{tpu_custom_call.1} parent=1 // loop_footer
      %s18 = sadd.s32 1, %s14
    $region7: #{tpu_custom_call.1} parent=1 // loop_footer_branch
      %13 = sbr.rel target = $region3
    $region8: #{tpu_custom_call.1} parent=1 // loop_exit
      _
    %1099 = vsyncpa [#allocation7], 1
    %s1100 = scalar_lea.sflag [#allocation7], 1
    %1101 = vsyncpa %s1100, 1

</llo_original>
